<compile_context>
chip_gen: v7x
topology: tpu7x:2x2x1
jax: 0.10.0
libtpu: 0.0.40
codegen_flags: <defaults>
</compile_context>

<pallas_src>
import numpy as np

import jax
import jax.numpy as jnp
from jax.experimental import pallas as pl
from jax.experimental.pallas import tpu as pltpu


# ----------------------------------------------------------------------------
# The fused kernel: whole Net forward for one batch tile.
# ----------------------------------------------------------------------------
def _net_kernel(x_ref, a1_ref, b1_ref, a2_ref, b2_ref,
                w1_ref, c1_ref, w2_ref, c2_ref, w3_ref, c3_ref, o_ref):
    TB = x_ref.shape[0]
    bf = jnp.bfloat16

    # ---- conv1 (1->6, k5) as ONE Toeplitz matmul, K = 5*28 = 140 ----
    xb = x_ref[...].astype(bf).reshape(TB, 28, 28)          # single cast + reshape
    op1 = jnp.concatenate([xb[:, di:di + 24, :] for di in range(5)],
                          axis=-1).reshape(TB * 24, 140)    # (TB*24, 140) bf16
    h1 = jnp.dot(op1, a1_ref[...], preferred_element_type=jnp.float32)
    h1 = jnp.maximum(h1 + b1_ref[...], 0.0)                 # (TB*24, 144)
    # 2x2 max-pool: columns are [even j | odd j] halves -> lane-dense max;
    # rows pooled with a sublane pair-reduce.
    h1 = jnp.maximum(h1[:, :72], h1[:, 72:])                # (TB*24, 72)
    h1 = h1.reshape(TB, 12, 2, 72).max(axis=2)              # (TB, 12, 72)

    # ---- conv2 (6->16, k5) as ONE Toeplitz matmul, K = 5*72 = 360 ----
    h1b = h1.astype(bf)                                     # single cast
    op2 = jnp.concatenate([h1b[:, di:di + 8, :] for di in range(5)],
                          axis=-1).reshape(TB * 8, 360)     # (TB*8, 360) bf16
    h2 = jnp.dot(op2, a2_ref[...], preferred_element_type=jnp.float32)
    h2 = jnp.maximum(h2 + b2_ref[...], 0.0)                 # (TB*8, 128)
    h2 = jnp.maximum(h2[:, :64], h2[:, 64:])                # (TB*8, 64)
    h2 = h2.reshape(TB, 4, 2, 64).max(axis=2)               # (TB, 4, 64)

    # ---- fc1 (256 -> 120, N padded to 128): ONE matmul, K = 256 ----
    f1 = jnp.dot(h2.reshape(TB, 256).astype(bf), w1_ref[...],
                 preferred_element_type=jnp.float32)
    f1 = jnp.maximum(f1 + c1_ref[...], 0.0)                 # (TB, 128), cols 120.. are 0

    # ---- fc2 -> relu -> fc3 (all operands 128-lane dense) ----
    f2 = jnp.dot(f1.astype(bf), w2_ref[...],
                 preferred_element_type=jnp.float32)
    f2 = jnp.maximum(f2 + c2_ref[...], 0.0)                 # (TB, 128), cols 84.. are 0
    out = jnp.dot(f2.astype(bf), w3_ref[...],
                  preferred_element_type=jnp.float32) + c3_ref[...]
    o_ref[...] = out.astype(o_ref.dtype)                    # (TB, 128), cols 10.. are 0


# ----------------------------------------------------------------------------
# Batch-tile selection: <=256 rows per step, >=2 grid steps when possible so
# the "parallel" grid axis can shard across v7x's two TensorCores.
# ----------------------------------------------------------------------------
def _tile_batch(B: int) -> int:
    if B <= 8:
        return B                      # single full-extent tile
    tb = min(256, (B + 1) // 2)       # split into at least 2 steps, cap at 256
    tb = ((tb + 7) // 8) * 8          # sublane-aligned tile
    return min(tb, B)


# ----------------------------------------------------------------------------
# Forward pass wrapper (one pallas_call, batch-tiled parallel grid).
# ----------------------------------------------------------------------------
@jax.jit
def net_forward(x_nchw, p):
    B = x_nchw.shape[0]
    # Lane-dense input feed (Cin == 1). dtype is preserved: pass bf16 images
    # upstream if available; the single in-kernel cast is then a no-op.
    x = x_nchw.reshape(B, 28 * 28)
    TB = _tile_batch(B)
    grid = (pl.cdiv(B, TB),)

    out = pl.pallas_call(
        _net_kernel,
        out_shape=jax.ShapeDtypeStruct((B, 128), jnp.float32),
        grid=grid,
        in_specs=[
            pl.BlockSpec((TB, 28 * 28), lambda i: (i, 0)),   # x (batch-tiled, lane-dense)
            pl.BlockSpec((140, 144), lambda i: (0, 0)),      # conv1 stacked Toeplitz
            pl.BlockSpec((1, 144), lambda i: (0, 0)),        # conv1 bias row
            pl.BlockSpec((360, 128), lambda i: (0, 0)),      # conv2 stacked Toeplitz
            pl.BlockSpec((1, 128), lambda i: (0, 0)),        # conv2 bias row
            pl.BlockSpec((256, 128), lambda i: (0, 0)),      # fc1 (permuted, N-padded)
            pl.BlockSpec((1, 128), lambda i: (0, 0)),        # fc1 bias (padded)
            pl.BlockSpec((128, 128), lambda i: (0, 0)),      # fc2 (K/N padded)
            pl.BlockSpec((1, 128), lambda i: (0, 0)),        # fc2 bias (padded)
            pl.BlockSpec((128, 128), lambda i: (0, 0)),      # fc3 (K/N padded)
            pl.BlockSpec((1, 128), lambda i: (0, 0)),        # fc3 bias (padded)
        ],
        out_specs=pl.BlockSpec((TB, 128), lambda i: (i, 0)),
        compiler_params=pltpu.CompilerParams(
            dimension_semantics=("parallel",),
            vmem_limit_bytes=48 * 1024 * 1024,
        ),
    )(x, p["a1"], p["b1"], p["a2"], p["b2"],
      p["w1"], p["c1"], p["w2"], p["c2"], p["w3"], p["c3"])
    return out[:, :10]


# ----------------------------------------------------------------------------
# One-time (host-side) weight preparation from PyTorch-layout parameters.
# ----------------------------------------------------------------------------
def prepare_params(p):
    w1 = np.asarray(p["conv1_w"], np.float32)     # (6, 1, 5, 5)
    b1 = np.asarray(p["conv1_b"], np.float32)     # (6,)
    w2 = np.asarray(p["conv2_w"], np.float32)     # (16, 6, 5, 5)
    b2 = np.asarray(p["conv2_b"], np.float32)     # (16,)
    fc1_w = np.asarray(p["fc1_w"], np.float32)    # (120, 256)
    fc1_b = np.asarray(p["fc1_b"], np.float32)
    fc2_w = np.asarray(p["fc2_w"], np.float32)    # (84, 120)
    fc2_b = np.asarray(p["fc2_b"], np.float32)
    fc3_w = np.asarray(p["fc3_w"], np.float32)    # (10, 84)
    fc3_b = np.asarray(p["fc3_b"], np.float32)

    # conv1 "Toeplitz-along-width": for row-shift di, row (di*28 + k) maps input
    # row element k to output column n = (j%2)*72 + co*12 + j//2  (even/odd
    # spatial columns split into halves for the lane-dense pool max).
    a1 = np.zeros((5, 28, 144), np.float32)
    for di in range(5):
        for co in range(6):
            for j in range(24):
                n = (j % 2) * 72 + co * 12 + (j // 2)
                for dj in range(5):
                    a1[di, j + dj, n] = w1[co, 0, di, dj]
    a1 = a1.reshape(140, 144)                                       # fused K = 140
    b1_row = np.concatenate([np.repeat(b1, 12)] * 2)[None, :]       # (1, 144)

    # conv2: input row layout (ci, j') with 6*12 = 72 features; output columns
    # n = (j%2)*64 + co*4 + j//2 (exactly 128 lanes). Fused K = 360.
    a2 = np.zeros((5, 72, 128), np.float32)
    for di in range(5):
        for co in range(16):
            for ci in range(6):
                for j in range(8):
                    n = (j % 2) * 64 + co * 4 + (j // 2)
                    for dj in range(5):
                        a2[di, ci * 12 + j + dj, n] = w2[co, ci, di, dj]
    a2 = a2.reshape(360, 128)
    b2_row = np.concatenate([np.repeat(b2, 4)] * 2)[None, :]        # (1, 128)

    # fc1: permute columns from PyTorch NCHW-flatten order (co, i, j) to the
    # kernel's pooled layout (i, co, j); single (256, 120) weight, N padded to 128.
    w1s = fc1_w.reshape(120, 16, 4, 4).transpose(2, 1, 3, 0).reshape(256, 120)
    w1p = np.zeros((256, 128), np.float32); w1p[:, :120] = w1s
    c1p = np.zeros((1, 128), np.float32);   c1p[0, :120] = fc1_b

    # fc2 / fc3: zero-pad K and N to 128 lanes (padded activations are exactly 0,
    # padded weight rows/cols are 0, so results are unchanged).
    w2p = np.zeros((128, 128), np.float32); w2p[:120, :84] = fc2_w.T
    c2p = np.zeros((1, 128), np.float32);   c2p[0, :84] = fc2_b
    w3p = np.zeros((128, 128), np.float32); w3p[:84, :10] = fc3_w.T
    c3p = np.zeros((1, 128), np.float32);   c3p[0, :10] = fc3_b

    bf = jnp.bfloat16
    return {
        "a1": jnp.asarray(a1, dtype=bf), "b1": jnp.asarray(b1_row),
        "a2": jnp.asarray(a2, dtype=bf), "b2": jnp.asarray(b2_row),
        "w1": jnp.asarray(w1p, dtype=bf), "c1": jnp.asarray(c1p),
        "w2": jnp.asarray(w2p, dtype=bf), "c2": jnp.asarray(c2p),
        "w3": jnp.asarray(w3p, dtype=bf), "c3": jnp.asarray(c3p),
    }


# ----------------------------------------------------------------------------
# Deterministic PyTorch-shaped parameters + pure-JAX reference for validation.
# ----------------------------------------------------------------------------
def init_params():
    k = jax.random.split(jax.random.PRNGKey(42), 10)
    def n(key, shape, fan_in):
        return (1.0 / np.sqrt(fan_in)) * jax.random.normal(key, shape, jnp.float32)
    return {
        "conv1_w": n(k[0], (6, 1, 5, 5), 25),   "conv1_b": n(k[1], (6,), 25),
        "conv2_w": n(k[2], (16, 6, 5, 5), 150), "conv2_b": n(k[3], (16,), 150),
        "fc1_w": n(k[4], (120, 256), 256), "fc1_b": n(k[5], (120,), 256),
        "fc2_w": n(k[6], (84, 120), 120),  "fc2_b": n(k[7], (84,), 120),
        "fc3_w": n(k[8], (10, 84), 84),    "fc3_b": n(k[9], (10,), 84),
    }


def net_reference(x_nchw, p):
    def conv(x, w, b):
        y = jax.lax.conv_general_dilated(
            x, w, (1, 1), "VALID", dimension_numbers=("NCHW", "OIHW", "NCHW"))
        return y + b.reshape(1, -1, 1, 1)

    def pool(x):
        return jax.lax.reduce_window(x, -jnp.inf, jax.lax.max,
                                     (1, 1, 2, 2), (1, 1, 2, 2), "VALID")

    h = pool(jax.nn.relu(conv(x_nchw, p["conv1_w"], p["conv1_b"])))
    h = pool(jax.nn.relu(conv(h, p["conv2_w"], p["conv2_b"])))
    flat = h.reshape(h.shape[0], -1)
    f1 = jax.nn.relu(flat @ p["fc1_w"].T + p["fc1_b"])
    f2 = jax.nn.relu(f1 @ p["fc2_w"].T + p["fc2_b"])
    return f2 @ p["fc3_w"].T + p["fc3_b"]


if __name__ == "__main__":
    params = init_params()
    prepared = prepare_params(params)

    # small deterministic input consistent with the module: (B=2, C=1, 28, 28)
    x = jax.random.normal(jax.random.PRNGKey(0), (2, 1, 28, 28), jnp.float32)
    y = jax.block_until_ready(net_forward(x, prepared))
    assert y.shape == (2, 10) and y.dtype == jnp.float32

    # correctness vs. f32 XLA reference (bf16 matmul operands => small deviation)
    y_ref = jax.block_until_ready(net_reference(x, params))
    np.testing.assert_allclose(np.asarray(y), np.asarray(y_ref), rtol=0.06, atol=0.05)

    # also exercise the multi-step parallel grid + partial last tile path
    xb = jax.random.normal(jax.random.PRNGKey(1), (20, 1, 28, 28), jnp.float32)
    yb = jax.block_until_ready(net_forward(xb, prepared))
    yb_ref = jax.block_until_ready(net_reference(xb, params))
    np.testing.assert_allclose(np.asarray(yb), np.asarray(yb_ref), rtol=0.06, atol=0.05)

    print("KERNEL_OK")
</pallas_src>

<mosaic_0001>
module attributes {stable_mosaic.version = 11 : i64} {
  func.func @_net_kernel(%arg0: i32, %arg1: memref<2x784xf32, #tpu.memory_space<vmem>>, %arg2: memref<140x144xbf16, #tpu.memory_space<vmem>>, %arg3: memref<1x144xf32, #tpu.memory_space<vmem>>, %arg4: memref<360x128xbf16, #tpu.memory_space<vmem>>, %arg5: memref<1x128xf32, #tpu.memory_space<vmem>>, %arg6: memref<256x128xbf16, #tpu.memory_space<vmem>>, %arg7: memref<1x128xf32, #tpu.memory_space<vmem>>, %arg8: memref<128x128xbf16, #tpu.memory_space<vmem>>, %arg9: memref<1x128xf32, #tpu.memory_space<vmem>>, %arg10: memref<128x128xbf16, #tpu.memory_space<vmem>>, %arg11: memref<1x128xf32, #tpu.memory_space<vmem>>, %arg12: memref<2x128xf32, #tpu.memory_space<vmem>>) attributes {dimension_semantics = [#tpu.dimension_semantics<parallel>], iteration_bounds = array<i64: 1>, scalar_prefetch = 0 : i64, scratch_operands = 0 : i64, tpu.core_type = #tpu.core_type<tc>, window_params = [{transform_indices = @transform_0, window_bounds = array<i64: 2, 784>}, {pipeline_mode = #tpu.pipeline_mode<synchronous>, transform_indices = @transform_1, window_bounds = array<i64: 140, 144>}, {pipeline_mode = #tpu.pipeline_mode<synchronous>, transform_indices = @transform_2, window_bounds = array<i64: 1, 144>}, {pipeline_mode = #tpu.pipeline_mode<synchronous>, transform_indices = @transform_3, window_bounds = array<i64: 360, 128>}, {pipeline_mode = #tpu.pipeline_mode<synchronous>, transform_indices = @transform_4, window_bounds = array<i64: 1, 128>}, {pipeline_mode = #tpu.pipeline_mode<synchronous>, transform_indices = @transform_5, window_bounds = array<i64: 256, 128>}, {pipeline_mode = #tpu.pipeline_mode<synchronous>, transform_indices = @transform_6, window_bounds = array<i64: 1, 128>}, {pipeline_mode = #tpu.pipeline_mode<synchronous>, transform_indices = @transform_7, window_bounds = array<i64: 128, 128>}, {pipeline_mode = #tpu.pipeline_mode<synchronous>, transform_indices = @transform_8, window_bounds = array<i64: 1, 128>}, {pipeline_mode = #tpu.pipeline_mode<synchronous>, transform_indices = @transform_9, window_bounds = array<i64: 128, 128>}, {pipeline_mode = #tpu.pipeline_mode<synchronous>, transform_indices = @transform_10, window_bounds = array<i64: 1, 128>}, {transform_indices = @transform_11, window_bounds = array<i64: 2, 128>}]} {
    %c0 = arith.constant 0 : index
    %c0_0 = arith.constant 0 : index
    %0 = vector.load %arg1[%c0, %c0_0] : memref<2x784xf32, #tpu.memory_space<vmem>>, vector<2x784xf32>
    %1 = arith.truncf %0 : vector<2x784xf32> to vector<2x784xbf16>
    %2 = vector.shape_cast %1 : vector<2x784xbf16> to vector<2x28x28xbf16>
    %3 = vector.extract_strided_slice %2 {offsets = [0, 0, 0], sizes = [2, 24, 28], strides = [1, 1, 1]} : vector<2x28x28xbf16> to vector<2x24x28xbf16>
    %4 = vector.extract_strided_slice %2 {offsets = [0, 1, 0], sizes = [2, 24, 28], strides = [1, 1, 1]} : vector<2x28x28xbf16> to vector<2x24x28xbf16>
    %5 = vector.extract_strided_slice %2 {offsets = [0, 2, 0], sizes = [2, 24, 28], strides = [1, 1, 1]} : vector<2x28x28xbf16> to vector<2x24x28xbf16>
    %6 = vector.extract_strided_slice %2 {offsets = [0, 3, 0], sizes = [2, 24, 28], strides = [1, 1, 1]} : vector<2x28x28xbf16> to vector<2x24x28xbf16>
    %7 = vector.extract_strided_slice %2 {offsets = [0, 4, 0], sizes = [2, 24, 28], strides = [1, 1, 1]} : vector<2x28x28xbf16> to vector<2x24x28xbf16>
    %8 = tpu.concatenate %3, %4, %5, %6, %7 in 2 : vector<2x24x28xbf16>, vector<2x24x28xbf16>, vector<2x24x28xbf16>, vector<2x24x28xbf16>, vector<2x24x28xbf16> -> vector<2x24x140xbf16>
    %9 = vector.shape_cast %8 : vector<2x24x140xbf16> to vector<48x140xbf16>
    %c0_1 = arith.constant 0 : index
    %c0_2 = arith.constant 0 : index
    %10 = vector.load %arg2[%c0_1, %c0_2] : memref<140x144xbf16, #tpu.memory_space<vmem>>, vector<140x144xbf16>
    %cst = arith.constant dense<0.000000e+00> : vector<48x144xf32>
    %11 = tpu.matmul %9, %10, %cst {dimension_numbers = #tpu.dot_dimension_numbers<[1], [0], [0], [1], [0, 0, 1, 1], [], []>} : vector<48x140xbf16>, vector<140x144xbf16>, vector<48x144xf32> -> vector<48x144xf32>
    %c0_3 = arith.constant 0 : index
    %c0_4 = arith.constant 0 : index
    %12 = vector.load %arg3[%c0_3, %c0_4] : memref<1x144xf32, #tpu.memory_space<vmem>>, vector<1x144xf32>
    %13 = vector.broadcast %12 : vector<1x144xf32> to vector<48x144xf32>
    %14 = arith.addf %11, %13 : vector<48x144xf32>
    %cst_5 = arith.constant 0.000000e+00 : f32
    %15 = vector.broadcast %cst_5 : f32 to vector<48x144xf32>
    %16 = arith.maximumf %14, %15 : vector<48x144xf32>
    %17 = vector.extract_strided_slice %16 {offsets = [0, 0], sizes = [48, 72], strides = [1, 1]} : vector<48x144xf32> to vector<48x72xf32>
    %18 = vector.extract_strided_slice %16 {offsets = [0, 72], sizes = [48, 72], strides = [1, 1]} : vector<48x144xf32> to vector<48x72xf32>
    %19 = arith.maximumf %17, %18 : vector<48x72xf32>
    %20 = vector.shape_cast %19 : vector<48x72xf32> to vector<2x12x2x72xf32>
    %cst_6 = arith.constant dense<0xFF800000> : vector<2x12x72xf32>
    %21 = vector.multi_reduction <maximumf>, %20, %cst_6 [2] : vector<2x12x2x72xf32> to vector<2x12x72xf32>
    %22 = arith.truncf %21 : vector<2x12x72xf32> to vector<2x12x72xbf16>
    %23 = vector.extract_strided_slice %22 {offsets = [0, 0, 0], sizes = [2, 8, 72], strides = [1, 1, 1]} : vector<2x12x72xbf16> to vector<2x8x72xbf16>
    %24 = vector.extract_strided_slice %22 {offsets = [0, 1, 0], sizes = [2, 8, 72], strides = [1, 1, 1]} : vector<2x12x72xbf16> to vector<2x8x72xbf16>
    %25 = vector.extract_strided_slice %22 {offsets = [0, 2, 0], sizes = [2, 8, 72], strides = [1, 1, 1]} : vector<2x12x72xbf16> to vector<2x8x72xbf16>
    %26 = vector.extract_strided_slice %22 {offsets = [0, 3, 0], sizes = [2, 8, 72], strides = [1, 1, 1]} : vector<2x12x72xbf16> to vector<2x8x72xbf16>
    %27 = vector.extract_strided_slice %22 {offsets = [0, 4, 0], sizes = [2, 8, 72], strides = [1, 1, 1]} : vector<2x12x72xbf16> to vector<2x8x72xbf16>
    %28 = tpu.concatenate %23, %24, %25, %26, %27 in 2 : vector<2x8x72xbf16>, vector<2x8x72xbf16>, vector<2x8x72xbf16>, vector<2x8x72xbf16>, vector<2x8x72xbf16> -> vector<2x8x360xbf16>
    %29 = vector.shape_cast %28 : vector<2x8x360xbf16> to vector<16x360xbf16>
    %c0_7 = arith.constant 0 : index
    %c0_8 = arith.constant 0 : index
    %30 = vector.load %arg4[%c0_7, %c0_8] : memref<360x128xbf16, #tpu.memory_space<vmem>>, vector<360x128xbf16>
    %cst_9 = arith.constant dense<0.000000e+00> : vector<16x128xf32>
    %31 = tpu.matmul %29, %30, %cst_9 {dimension_numbers = #tpu.dot_dimension_numbers<[1], [0], [0], [1], [0, 0, 1, 1], [], []>} : vector<16x360xbf16>, vector<360x128xbf16>, vector<16x128xf32> -> vector<16x128xf32>
    %c0_10 = arith.constant 0 : index
    %c0_11 = arith.constant 0 : index
    %32 = vector.load %arg5[%c0_10, %c0_11] : memref<1x128xf32, #tpu.memory_space<vmem>>, vector<1x128xf32>
    %33 = vector.broadcast %32 : vector<1x128xf32> to vector<16x128xf32>
    %34 = arith.addf %31, %33 : vector<16x128xf32>
    %cst_12 = arith.constant 0.000000e+00 : f32
    %35 = vector.broadcast %cst_12 : f32 to vector<16x128xf32>
    %36 = arith.maximumf %34, %35 : vector<16x128xf32>
    %37 = vector.extract_strided_slice %36 {offsets = [0, 0], sizes = [16, 64], strides = [1, 1]} : vector<16x128xf32> to vector<16x64xf32>
    %38 = vector.extract_strided_slice %36 {offsets = [0, 64], sizes = [16, 64], strides = [1, 1]} : vector<16x128xf32> to vector<16x64xf32>
    %39 = arith.maximumf %37, %38 : vector<16x64xf32>
    %40 = vector.shape_cast %39 : vector<16x64xf32> to vector<2x4x2x64xf32>
    %cst_13 = arith.constant dense<0xFF800000> : vector<2x4x64xf32>
    %41 = vector.multi_reduction <maximumf>, %40, %cst_13 [2] : vector<2x4x2x64xf32> to vector<2x4x64xf32>
    %42 = vector.shape_cast %41 : vector<2x4x64xf32> to vector<2x256xf32>
    %43 = arith.truncf %42 : vector<2x256xf32> to vector<2x256xbf16>
    %c0_14 = arith.constant 0 : index
    %c0_15 = arith.constant 0 : index
    %44 = vector.load %arg6[%c0_14, %c0_15] : memref<256x128xbf16, #tpu.memory_space<vmem>>, vector<256x128xbf16>
    %cst_16 = arith.constant dense<0.000000e+00> : vector<2x128xf32>
    %45 = tpu.matmul %43, %44, %cst_16 {dimension_numbers = #tpu.dot_dimension_numbers<[1], [0], [0], [1], [0, 0, 1, 1], [], []>} : vector<2x256xbf16>, vector<256x128xbf16>, vector<2x128xf32> -> vector<2x128xf32>
    %c0_17 = arith.constant 0 : index
    %c0_18 = arith.constant 0 : index
    %46 = vector.load %arg7[%c0_17, %c0_18] : memref<1x128xf32, #tpu.memory_space<vmem>>, vector<1x128xf32>
    %47 = vector.broadcast %46 : vector<1x128xf32> to vector<2x128xf32>
    %48 = arith.addf %45, %47 : vector<2x128xf32>
    %cst_19 = arith.constant 0.000000e+00 : f32
    %49 = vector.broadcast %cst_19 : f32 to vector<2x128xf32>
    %50 = arith.maximumf %48, %49 : vector<2x128xf32>
    %51 = arith.truncf %50 : vector<2x128xf32> to vector<2x128xbf16>
    %c0_20 = arith.constant 0 : index
    %c0_21 = arith.constant 0 : index
    %52 = vector.load %arg8[%c0_20, %c0_21] : memref<128x128xbf16, #tpu.memory_space<vmem>>, vector<128x128xbf16>
    %cst_22 = arith.constant dense<0.000000e+00> : vector<2x128xf32>
    %53 = tpu.matmul %51, %52, %cst_22 {dimension_numbers = #tpu.dot_dimension_numbers<[1], [0], [0], [1], [0, 0, 1, 1], [], []>} : vector<2x128xbf16>, vector<128x128xbf16>, vector<2x128xf32> -> vector<2x128xf32>
    %c0_23 = arith.constant 0 : index
    %c0_24 = arith.constant 0 : index
    %54 = vector.load %arg9[%c0_23, %c0_24] : memref<1x128xf32, #tpu.memory_space<vmem>>, vector<1x128xf32>
    %55 = vector.broadcast %54 : vector<1x128xf32> to vector<2x128xf32>
    %56 = arith.addf %53, %55 : vector<2x128xf32>
    %cst_25 = arith.constant 0.000000e+00 : f32
    %57 = vector.broadcast %cst_25 : f32 to vector<2x128xf32>
    %58 = arith.maximumf %56, %57 : vector<2x128xf32>
    %59 = arith.truncf %58 : vector<2x128xf32> to vector<2x128xbf16>
    %c0_26 = arith.constant 0 : index
    %c0_27 = arith.constant 0 : index
    %60 = vector.load %arg10[%c0_26, %c0_27] : memref<128x128xbf16, #tpu.memory_space<vmem>>, vector<128x128xbf16>
    %cst_28 = arith.constant dense<0.000000e+00> : vector<2x128xf32>
    %61 = tpu.matmul %59, %60, %cst_28 {dimension_numbers = #tpu.dot_dimension_numbers<[1], [0], [0], [1], [0, 0, 1, 1], [], []>} : vector<2x128xbf16>, vector<128x128xbf16>, vector<2x128xf32> -> vector<2x128xf32>
    %c0_29 = arith.constant 0 : index
    %c0_30 = arith.constant 0 : index
    %62 = vector.load %arg11[%c0_29, %c0_30] : memref<1x128xf32, #tpu.memory_space<vmem>>, vector<1x128xf32>
    %63 = vector.broadcast %62 : vector<1x128xf32> to vector<2x128xf32>
    %64 = arith.addf %61, %63 : vector<2x128xf32>
    %c0_31 = arith.constant 0 : index
    %c0_32 = arith.constant 0 : index
    %65 = vector.load %arg12[%c0_31, %c0_32] : memref<2x128xf32, #tpu.memory_space<vmem>>, vector<2x128xf32>
    tpu.vector_store %arg12[%c0_31, %c0_32], %64 {strides = array<i32>} : memref<2x128xf32, #tpu.memory_space<vmem>>, vector<2x128xf32>,
    return
  }
  func.func @transform_0(%arg0: i32) -> (i32, i32) {
    %c0_i32 = arith.constant 0 : i32
    %c0_i32_0 = arith.constant 0 : i32
    return %arg0, %c0_i32 : i32, i32
  }
  func.func @transform_1(%arg0: i32) -> (i32, i32) {
    %c0_i32 = arith.constant 0 : i32
    %c0_i32_0 = arith.constant 0 : i32
    %c0_i32_1 = arith.constant 0 : i32
    return %c0_i32, %c0_i32_0 : i32, i32
  }
  func.func @transform_2(%arg0: i32) -> (i32, i32) {
    %c0_i32 = arith.constant 0 : i32
    %c0_i32_0 = arith.constant 0 : i32
    %c0_i32_1 = arith.constant 0 : i32
    return %c0_i32, %c0_i32_0 : i32, i32
  }
  func.func @transform_3(%arg0: i32) -> (i32, i32) {
    %c0_i32 = arith.constant 0 : i32
    %c0_i32_0 = arith.constant 0 : i32
    %c0_i32_1 = arith.constant 0 : i32
    return %c0_i32, %c0_i32_0 : i32, i32
  }
  func.func @transform_4(%arg0: i32) -> (i32, i32) {
    %c0_i32 = arith.constant 0 : i32
    %c0_i32_0 = arith.constant 0 : i32
    %c0_i32_1 = arith.constant 0 : i32
    return %c0_i32, %c0_i32_0 : i32, i32
  }
  func.func @transform_5(%arg0: i32) -> (i32, i32) {
    %c0_i32 = arith.constant 0 : i32
    %c0_i32_0 = arith.constant 0 : i32
    %c0_i32_1 = arith.constant 0 : i32
    return %c0_i32, %c0_i32_0 : i32, i32
  }
  func.func @transform_6(%arg0: i32) -> (i32, i32) {
    %c0_i32 = arith.constant 0 : i32
    %c0_i32_0 = arith.constant 0 : i32
    %c0_i32_1 = arith.constant 0 : i32
    return %c0_i32, %c0_i32_0 : i32, i32
  }
  func.func @transform_7(%arg0: i32) -> (i32, i32) {
    %c0_i32 = arith.constant 0 : i32
    %c0_i32_0 = arith.constant 0 : i32
    %c0_i32_1 = arith.constant 0 : i32
    return %c0_i32, %c0_i32_0 : i32, i32
  }
  func.func @transform_8(%arg0: i32) -> (i32, i32) {
    %c0_i32 = arith.constant 0 : i32
    %c0_i32_0 = arith.constant 0 : i32
    %c0_i32_1 = arith.constant 0 : i32
    return %c0_i32, %c0_i32_0 : i32, i32
  }
  func.func @transform_9(%arg0: i32) -> (i32, i32) {
    %c0_i32 = arith.constant 0 : i32
    %c0_i32_0 = arith.constant 0 : i32
    %c0_i32_1 = arith.constant 0 : i32
    return %c0_i32, %c0_i32_0 : i32, i32
  }
  func.func @transform_10(%arg0: i32) -> (i32, i32) {
    %c0_i32 = arith.constant 0 : i32
    %c0_i32_0 = arith.constant 0 : i32
    %c0_i32_1 = arith.constant 0 : i32
    return %c0_i32, %c0_i32_0 : i32, i32
  }
  func.func @transform_11(%arg0: i32) -> (i32, i32) {
    %c0_i32 = arith.constant 0 : i32
    %c0_i32_0 = arith.constant 0 : i32
    return %arg0, %c0_i32 : i32, i32
  }
}

</mosaic_0001>

<llo_original>
// kernel: net_forward.1
$region0: #{net_forward.1}
  #allocation0 [shape = 'u32[]', space=smem, size = 0x4, offset = 0x4, fixed_abs, tag = 'smem constant byte address 0x4 - core index']
  #allocation1 [shape = 'u32[144,128]{1,0:T(1,128)}', space=vmem, size = 0x12000, scoped, tag = 'internal scratch']
  %s0 = inlined_call_operand.vmem [shape: f32[2,784], index: 0, kind: input, shape index: {}]
  %s1 = inlined_call_operand.hbm [shape: bf16[140,144], index: 1, kind: input, shape index: {}]
  %s2 = inlined_call_operand.vmem [shape: f32[1,144], index: 2, kind: input, shape index: {}]
  %s3 = inlined_call_operand.vmem [shape: bf16[360,128], index: 3, kind: input, shape index: {}]
  %s4 = inlined_call_operand.vmem [shape: f32[1,128], index: 4, kind: input, shape index: {}]
  %s5 = inlined_call_operand.hbm [shape: bf16[256,128], index: 5, kind: input, shape index: {}]
  %s6 = inlined_call_operand.vmem [shape: f32[1,128], index: 6, kind: input, shape index: {}]
  %s7 = inlined_call_operand.hbm [shape: bf16[128,128], index: 7, kind: input, shape index: {}]
  %s8 = inlined_call_operand.vmem [shape: f32[1,128], index: 8, kind: input, shape index: {}]
  %s9 = inlined_call_operand.hbm [shape: bf16[128,128], index: 9, kind: input, shape index: {}]
  %s10 = inlined_call_operand.vmem [shape: f32[1,128], index: 10, kind: input, shape index: {}]
  %s11 = inlined_call_operand.hbm [shape: f32[2,128], index: 11, kind: output, shape index: {}]
  %s12 = sld [smem:[#allocation0]]
  $region70: #{net_forward.1} parent=0
    _
  %s14 = ssub.s32 1, %s12
  %s15 = scalar_select 0, %s14, %s12
  $region1: #{net_forward.1} parent=0
    #allocation2 [shape = 'u8[73728]{0}', space=vmem, size = 0x12000, scoped, tag = 'input window, operand 1, single buffered']
    #allocation3 [shape = 's32[1]{0}', space=sflag, size = 0x4, scoped, tag = 'scoped memory for net_forward.1']
    #allocation4 [shape = 's32[1]{0}', space=sflag, size = 0x4, scoped, tag = 'scoped memory for net_forward.1']
    #allocation5 [shape = 'u8[65536]{0}', space=vmem, size = 0x10000, scoped, tag = 'input window, operand 5, single buffered']
    #allocation6 [shape = 's32[1]{0}', space=sflag, size = 0x4, scoped, tag = 'scoped memory for net_forward.1']
    #allocation7 [shape = 'u8[32768]{0}', space=vmem, size = 0x8000, scoped, tag = 'input window, operand 7, single buffered']
    #allocation8 [shape = 'u8[32768]{0}', space=vmem, size = 0x8000, scoped, tag = 'input window, operand 9, single buffered']
    #allocation9 [shape = 's32[1]{0}', space=sflag, size = 0x4, scoped, tag = 'scoped memory for net_forward.1']
    #allocation10 [shape = 'u8[1024]{0}', space=vmem, size = 0x400, scoped, tag = 'output window, operand 0, single buffered']
    %16 = vsyncpa [#allocation3], 0
    %17 = vsyncpa [#allocation6], 0
    %18 = vsyncpa [#allocation9], 0
    %19 = vsyncpa [#allocation4], 0
    // Predicated region
    $region2: #{net_forward.1} parent=1 // pred_check
      _
    $region3: #{net_forward.1} parent=1 // pred_check_branch
      %21 = sbr.rel (0) target = $region5
    $region4: #{net_forward.1} parent=1 // pred_region
      _
    $region5: #{net_forward.1} parent=1 // pred_fallthru
      _
    // Predicated region
    $region6: #{net_forward.1} parent=1 // pred_check
      _
    $region7: #{net_forward.1} parent=1 // pred_check_branch
      %23 = sbr.rel (0) target = $region9
    $region8: #{net_forward.1} parent=1 // pred_region
      %s25 = ssub.s32 2304, 2304
      %26 = vsyncadd [#allocation3], %s25
      %s27 = sshll.u32 [#allocation2], 4
      %s28 = int_to_ptr.vmem [resolvable:$true] %s27
      %33 = dma.hbm_to_vmem [thread:$0]  %s1, 2304, %s28, [#allocation3], 128, 128, 8
    $region9: #{net_forward.1} parent=1 // pred_fallthru
      _
    // Predicated region
    $region10: #{net_forward.1} parent=1 // pred_check
      _
    $region11: #{net_forward.1} parent=1 // pred_check_branch
      %35 = sbr.rel (0) target = $region13
    $region12: #{net_forward.1} parent=1 // pred_region
      _
    $region13: #{net_forward.1} parent=1 // pred_fallthru
      _
    // Predicated region
    $region14: #{net_forward.1} parent=1 // pred_check
      _
    $region15: #{net_forward.1} parent=1 // pred_check_branch
      %37 = sbr.rel (0) target = $region17
    $region16: #{net_forward.1} parent=1 // pred_region
      _
    $region17: #{net_forward.1} parent=1 // pred_fallthru
      _
    // Predicated region
    $region18: #{net_forward.1} parent=1 // pred_check
      _
    $region19: #{net_forward.1} parent=1 // pred_check_branch
      %39 = sbr.rel (0) target = $region21
    $region20: #{net_forward.1} parent=1 // pred_region
      _
    $region21: #{net_forward.1} parent=1 // pred_fallthru
      _
    // Predicated region
    $region22: #{net_forward.1} parent=1 // pred_check
      _
    $region23: #{net_forward.1} parent=1 // pred_check_branch
      %41 = sbr.rel (0) target = $region25
    $region24: #{net_forward.1} parent=1 // pred_region
      %s43 = ssub.s32 2048, 2048
      %44 = vsyncadd [#allocation6], %s43
      %s45 = sshll.u32 [#allocation5], 4
      %s46 = int_to_ptr.vmem [resolvable:$true] %s45
      %51 = dma.hbm_to_vmem [thread:$0]  %s5, 2048, %s46, [#allocation6], 64, 64, 4
    $region25: #{net_forward.1} parent=1 // pred_fallthru
      _
    // Predicated region
    $region26: #{net_forward.1} parent=1 // pred_check
      _
    $region27: #{net_forward.1} parent=1 // pred_check_branch
      %53 = sbr.rel (0) target = $region29
    $region28: #{net_forward.1} parent=1 // pred_region
      _
    $region29: #{net_forward.1} parent=1 // pred_fallthru
      _
    // Predicated region
    $region30: #{net_forward.1} parent=1 // pred_check
      _
    $region31: #{net_forward.1} parent=1 // pred_check_branch
      %55 = sbr.rel (0) target = $region33
    $region32: #{net_forward.1} parent=1 // pred_region
      %s57 = ssub.s32 1024, 1024
      %58 = vsyncadd [#allocation6], %s57
      %s59 = sshll.u32 [#allocation7], 4
      %s60 = int_to_ptr.vmem [resolvable:$true] %s59
      %65 = dma.hbm_to_vmem [thread:$0]  %s7, 1024, %s60, [#allocation6], 64, 64, 4
    $region33: #{net_forward.1} parent=1 // pred_fallthru
      _
    // Predicated region
    $region34: #{net_forward.1} parent=1 // pred_check
      _
    $region35: #{net_forward.1} parent=1 // pred_check_branch
      %67 = sbr.rel (0) target = $region37
    $region36: #{net_forward.1} parent=1 // pred_region
      _
    $region37: #{net_forward.1} parent=1 // pred_fallthru
      _
    // Predicated region
    $region38: #{net_forward.1} parent=1 // pred_check
      _
    $region39: #{net_forward.1} parent=1 // pred_check_branch
      %69 = sbr.rel (0) target = $region41
    $region40: #{net_forward.1} parent=1 // pred_region
      %s71 = ssub.s32 1024, 1024
      %72 = vsyncadd [#allocation9], %s71
      %s73 = sshll.u32 [#allocation8], 4
      %s74 = int_to_ptr.vmem [resolvable:$true] %s73
      %79 = dma.hbm_to_vmem [thread:$0]  %s9, 1024, %s74, [#allocation9], 64, 64, 4
    $region41: #{net_forward.1} parent=1 // pred_fallthru
      _
    // Predicated region
    $region42: #{net_forward.1} parent=1 // pred_check
      _
    $region43: #{net_forward.1} parent=1 // pred_check_branch
      %81 = sbr.rel (0) target = $region45
    $region44: #{net_forward.1} parent=1 // pred_region
      _
    $region45: #{net_forward.1} parent=1 // pred_fallthru
      _
    // Predicated region
    $region46: #{net_forward.1} parent=1 // pred_check
      _
    $region47: #{net_forward.1} parent=1 // pred_check_branch
      %83 = sbr.rel (0) target = $region49
    $region48: #{net_forward.1} parent=1 // pred_region
      %84 = dma.done [#allocation3], 2304
    $region49: #{net_forward.1} parent=1 // pred_fallthru
      _
    // Predicated region
    $region50: #{net_forward.1} parent=1 // pred_check
      _
    $region51: #{net_forward.1} parent=1 // pred_check_branch
      %86 = sbr.rel (0) target = $region53
    $region52: #{net_forward.1} parent=1 // pred_region
      %87 = dma.done [#allocation6], 2048
    $region53: #{net_forward.1} parent=1 // pred_fallthru
      _
    // Predicated region
    $region54: #{net_forward.1} parent=1 // pred_check
      _
    $region55: #{net_forward.1} parent=1 // pred_check_branch
      %89 = sbr.rel (0) target = $region57
    $region56: #{net_forward.1} parent=1 // pred_region
      %90 = dma.done [#allocation6], 1024
    $region57: #{net_forward.1} parent=1 // pred_fallthru
      _
    // Predicated region
    $region58: #{net_forward.1} parent=1 // pred_check
      _
    $region59: #{net_forward.1} parent=1 // pred_check_branch
      %92 = sbr.rel (0) target = $region61
    $region60: #{net_forward.1} parent=1 // pred_region
      %93 = dma.done [#allocation9], 1024
    $region61: #{net_forward.1} parent=1 // pred_fallthru
      _
    %v95 = vld [vmem:[%s0] sm:$0xff]
    %v96 = vld [vmem:[%s0 + $0x8] sm:$0x3f]
    %v99 = vcombine.high %v95, %v95
    %v101 = vunpack.c.l.s4 1983009808
    %v102 = vunpack.c.0.s8 %v101
    %v103 = vlaneseq
    %v104 = vshrl.u32 %v103, 7
    %v105 = vsub.s32 %v102, %v104
    %v106 = vrot.slane %v95, %v105
    %v108 = vunpack.c.l.s4 1983009808
    %v109 = vunpack.c.0.s8 %v108
    %v110 = vlaneseq
    %v111 = vshrl.u32 %v110, 7
    %v112 = vsub.s32 %v109, %v111
    %v113 = vrot.slane %v99, %v112
    %v114 = vcombine.high %v106, %v106
    %v115 = vcombine.high %v113, %v113
    %v116 = vcombine.high %v96, %v96
    %v118 = vunpack.c.l.s4 1983009808
    %v119 = vunpack.c.0.s8 %v118
    %v120 = vlaneseq
    %v121 = vshrl.u32 %v120, 7
    %v122 = vsub.s32 %v119, %v121
    %v123 = vrot.slane %v96, %v122
    %v125 = vunpack.c.l.s4 1983009808
    %v126 = vunpack.c.0.s8 %v125
    %v127 = vlaneseq
    %v128 = vshrl.u32 %v127, 7
    %v129 = vsub.s32 %v126, %v128
    %v130 = vrot.slane %v116, %v129
    %v131 = vcombine.high %v123, %v123
    %v139 = vpack.c.bf16 %v106, %v106
    %v140 = vpack.c.bf16 %v114, %v114
    %v141 = vpack.c.bf16 %v113, %v113
    %v142 = vpack.c.bf16 %v115, %v115
    %v143 = vpack.c.bf16 %v123, %v123
    %v144 = vpack.c.bf16 %v131, %v131
    %v145 = vpack.c.bf16 %v130, %v130
    %147 = vrot.lane.b32.xlu0 %v139, 100
    %v148 = vpop.permute.xlu0 %147
    %150 = vrot.lane.b32.xlu0 %v139, 72
    %v151 = vpop.permute.xlu0 %150
    %153 = vrot.lane.b32.xlu0 %v139, 44
    %v154 = vpop.permute.xlu0 %153
    %157 = vrot.lane.b32.xlu0 %v139, 16
    %v158 = vpop.permute.xlu0 %157
    %159 = vrot.lane.b32.xlu0 %v140, 16
    %v160 = vpop.permute.xlu0 %159
    %vm161 = vcmask 130048
    %v162 = vsel %vm161, %v158, %v160
    %164 = vrot.lane.b32.xlu0 %v140, 116
    %v165 = vpop.permute.xlu0 %164
    %167 = vrot.lane.b32.xlu0 %v140, 88
    %v168 = vpop.permute.xlu0 %167
    %170 = vrot.lane.b32.xlu0 %v140, 60
    %v171 = vpop.permute.xlu0 %170
    %173 = vrot.lane.b32.xlu0 %v140, 32
    %v174 = vpop.permute.xlu0 %173
    %177 = vrot.lane.b32.xlu0 %v140, 4
    %v178 = vpop.permute.xlu0 %177
    %179 = vrot.lane.b32.xlu0 %v141, 4
    %v180 = vpop.permute.xlu0 %179
    %vm181 = vcmask 31744
    %v182 = vsel %vm181, %v178, %v180
    %184 = vrot.lane.b32.xlu0 %v141, 104
    %v185 = vpop.permute.xlu0 %184
    %187 = vrot.lane.b32.xlu0 %v141, 76
    %v188 = vpop.permute.xlu0 %187
    %190 = vrot.lane.b32.xlu0 %v141, 48
    %v191 = vpop.permute.xlu0 %190
    %194 = vrot.lane.b32.xlu0 %v141, 20
    %v195 = vpop.permute.xlu0 %194
    %196 = vrot.lane.b32.xlu0 %v142, 20
    %v197 = vpop.permute.xlu0 %196
    %vm198 = vcmask 162816
    %v199 = vsel %vm198, %v195, %v197
    %201 = vrot.lane.b32.xlu0 %v142, 120
    %v202 = vpop.permute.xlu0 %201
    %204 = vrot.lane.b32.xlu0 %v142, 92
    %v205 = vpop.permute.xlu0 %204
    %207 = vrot.lane.b32.xlu0 %v142, 64
    %v208 = vpop.permute.xlu0 %207
    %210 = vrot.lane.b32.xlu0 %v142, 36
    %v211 = vpop.permute.xlu0 %210
    %214 = vrot.lane.b32.xlu0 %v142, 8
    %v215 = vpop.permute.xlu0 %214
    %216 = vrot.lane.b32.xlu0 %v143, 8
    %v217 = vpop.permute.xlu0 %216
    %vm218 = vcmask 64512
    %v219 = vsel %vm218, %v215, %v217
    %221 = vrot.lane.b32.xlu0 %v143, 108
    %v222 = vpop.permute.xlu0 %221
    %224 = vrot.lane.b32.xlu0 %v143, 80
    %v225 = vpop.permute.xlu0 %224
    %227 = vrot.lane.b32.xlu0 %v143, 52
    %v228 = vpop.permute.xlu0 %227
    %231 = vrot.lane.b32.xlu0 %v143, 24
    %v232 = vpop.permute.xlu0 %231
    %233 = vrot.lane.b32.xlu0 %v144, 24
    %v234 = vpop.permute.xlu0 %233
    %vm235 = vcmask 195584
    %v236 = vsel %vm235, %v232, %v234
    %238 = vrot.lane.b32.xlu0 %v144, 124
    %v239 = vpop.permute.xlu0 %238
    %241 = vrot.lane.b32.xlu0 %v144, 96
    %v242 = vpop.permute.xlu0 %241
    %243 = vrot.lane.b32.xlu0 %v144, 68
    %v244 = vpop.permute.xlu0 %243
    %245 = vrot.lane.b32.xlu0 %v144, 40
    %v246 = vpop.permute.xlu0 %245
    %248 = vrot.lane.b32.xlu0 %v144, 12
    %v249 = vpop.permute.xlu0 %248
    %250 = vrot.lane.b32.xlu0 %v145, 12
    %v251 = vpop.permute.xlu0 %250
    %vm252 = vcmask 97280
    %v253 = vsel %vm252, %v249, %v251
    %v254 = vcombine.low %v139, %v162
    %v256 = vunpack.c.l.s4 1983009808
    %v257 = vunpack.c.0.s8 %v256
    %v258 = vlaneseq
    %v259 = vshrl.u32 %v258, 7
    %v260 = vsub.s32 %v257, %v259
    %v261 = vrot.slane %v254, %v260
    %v262 = vcombine.low %v151, %v168
    %v264 = vunpack.c.l.s4 1983009808
    %v265 = vunpack.c.0.s8 %v264
    %v266 = vlaneseq
    %v267 = vshrl.u32 %v266, 7
    %v268 = vsub.s32 %v265, %v267
    %v269 = vrot.slane %v262, %v268
    %v270 = vcombine.low %v174, %v191
    %v272 = vunpack.c.l.s4 1983009808
    %v273 = vunpack.c.0.s8 %v272
    %v274 = vlaneseq
    %v275 = vshrl.u32 %v274, 7
    %v276 = vsub.s32 %v273, %v275
    %v277 = vrot.slane %v270, %v276
    %v278 = vcombine.low %v185, %v202
    %v280 = vunpack.c.l.s4 1983009808
    %v281 = vunpack.c.0.s8 %v280
    %v282 = vlaneseq
    %v283 = vshrl.u32 %v282, 7
    %v284 = vsub.s32 %v281, %v283
    %v285 = vrot.slane %v278, %v284
    %v286 = vcombine.low %v261, %v269
    %v288 = vunpack.c.l.s4 1934713408
    %v289 = vunpack.c.0.s8 %v288
    %v290 = vlaneseq
    %v291 = vshrl.u32 %v290, 7
    %v292 = vsub.s32 %v289, %v291
    %v293 = vrot.slane %v286, %v292
    %v294 = vcombine.low %v277, %v285
    %v296 = vunpack.c.l.s4 1934713408
    %v297 = vunpack.c.0.s8 %v296
    %v298 = vlaneseq
    %v299 = vshrl.u32 %v298, 7
    %v300 = vsub.s32 %v297, %v299
    %v301 = vrot.slane %v294, %v300
    %v302 = vcombine.low %v293, %v301
    %v303 = vcombine.low %v148, %v165
    %v305 = vunpack.c.l.s4 1983009808
    %v306 = vunpack.c.0.s8 %v305
    %v307 = vlaneseq
    %v308 = vshrl.u32 %v307, 7
    %v309 = vsub.s32 %v306, %v308
    %v310 = vrot.slane %v303, %v309
    %v311 = vcombine.low %v154, %v171
    %v313 = vunpack.c.l.s4 1983009808
    %v314 = vunpack.c.0.s8 %v313
    %v315 = vlaneseq
    %v316 = vshrl.u32 %v315, 7
    %v317 = vsub.s32 %v314, %v316
    %v318 = vrot.slane %v311, %v317
    %v319 = vcombine.low %v182, %v199
    %v321 = vunpack.c.l.s4 1983009808
    %v322 = vunpack.c.0.s8 %v321
    %v323 = vlaneseq
    %v324 = vshrl.u32 %v323, 7
    %v325 = vsub.s32 %v322, %v324
    %v326 = vrot.slane %v319, %v325
    %v327 = vcombine.low %v188, %v205
    %v329 = vunpack.c.l.s4 1983009808
    %v330 = vunpack.c.0.s8 %v329
    %v331 = vlaneseq
    %v332 = vshrl.u32 %v331, 7
    %v333 = vsub.s32 %v330, %v332
    %v334 = vrot.slane %v327, %v333
    %v335 = vcombine.low %v310, %v318
    %v337 = vunpack.c.l.s4 1934713408
    %v338 = vunpack.c.0.s8 %v337
    %v339 = vlaneseq
    %v340 = vshrl.u32 %v339, 7
    %v341 = vsub.s32 %v338, %v340
    %v342 = vrot.slane %v335, %v341
    %v343 = vcombine.low %v326, %v334
    %v345 = vunpack.c.l.s4 1934713408
    %v346 = vunpack.c.0.s8 %v345
    %v347 = vlaneseq
    %v348 = vshrl.u32 %v347, 7
    %v349 = vsub.s32 %v346, %v348
    %v350 = vrot.slane %v343, %v349
    %v351 = vcombine.low %v342, %v350
    %v352 = vcombine.low %v208, %v225
    %v354 = vunpack.c.l.s4 1983009808
    %v355 = vunpack.c.0.s8 %v354
    %v356 = vlaneseq
    %v357 = vshrl.u32 %v356, 7
    %v358 = vsub.s32 %v355, %v357
    %v359 = vrot.slane %v352, %v358
    %v360 = vcombine.low %v219, %v236
    %v362 = vunpack.c.l.s4 1983009808
    %v363 = vunpack.c.0.s8 %v362
    %v364 = vlaneseq
    %v365 = vshrl.u32 %v364, 7
    %v366 = vsub.s32 %v363, %v365
    %v367 = vrot.slane %v360, %v366
    %v370 = vcombine.low %v359, %v367
    %v372 = vunpack.c.l.s4 1934713408
    %v373 = vunpack.c.0.s8 %v372
    %v374 = vlaneseq
    %v375 = vshrl.u32 %v374, 7
    %v376 = vsub.s32 %v373, %v375
    %v377 = vrot.slane %v370, %v376
    %v378 = vcombine.low %v242, %v246
    %v380 = vunpack.c.l.s4 1934713408
    %v381 = vunpack.c.0.s8 %v380
    %v382 = vlaneseq
    %v383 = vshrl.u32 %v382, 7
    %v384 = vsub.s32 %v381, %v383
    %v385 = vrot.slane %v378, %v384
    %v386 = vcombine.low %v377, %v385
    %v387 = vcombine.low %v211, %v228
    %v389 = vunpack.c.l.s4 1983009808
    %v390 = vunpack.c.0.s8 %v389
    %v391 = vlaneseq
    %v392 = vshrl.u32 %v391, 7
    %v393 = vsub.s32 %v390, %v392
    %v394 = vrot.slane %v387, %v393
    %v395 = vcombine.low %v222, %v239
    %v397 = vunpack.c.l.s4 1983009808
    %v398 = vunpack.c.0.s8 %v397
    %v399 = vlaneseq
    %v400 = vshrl.u32 %v399, 7
    %v401 = vsub.s32 %v398, %v400
    %v402 = vrot.slane %v395, %v401
    %v405 = vcombine.low %v394, %v402
    %v407 = vunpack.c.l.s4 1934713408
    %v408 = vunpack.c.0.s8 %v407
    %v409 = vlaneseq
    %v410 = vshrl.u32 %v409, 7
    %v411 = vsub.s32 %v408, %v410
    %v412 = vrot.slane %v405, %v411
    %v413 = vcombine.low %v244, %v253
    %v415 = vunpack.c.l.s4 1934713408
    %v416 = vunpack.c.0.s8 %v415
    %v417 = vlaneseq
    %v418 = vshrl.u32 %v417, 7
    %v419 = vsub.s32 %v416, %v418
    %v420 = vrot.slane %v413, %v419
    %v421 = vcombine.low %v412, %v420
    %v424 = vpack.i.b16 %v351, %v302
    %v425 = vshrl.u32 %v302, 16
    %v426 = vshrl.u32 %v351, 16
    %v427 = vpack.i.b16 %v426, %v425
    %v430 = vpack.i.b16 %v421, %v386
    %v431 = vshrl.u32 %v386, 16
    %v432 = vshrl.u32 %v421, 16
    %v433 = vpack.i.b16 %v432, %v431
    %vm434 = vsmask.f32 7424
    %v436 = vshrl.u32 %v424, 16
    %v438 = vshll.u32 %v424, 16
    %v440 = vrot.slane %v438, 1
    %v441 = vor.u32 %v436, %v440
    %v443 = vshll.u32 %v430, 16
    %v445 = vrot.slane %v443, 1
    %v446 = vsel %vm434, %v441, %v445
    %v447 = vshrl.u32 %v430, 16
    %v449 = vor.u32 %v447, %v445
    %v451 = vshrl.u32 %v427, 16
    %v453 = vshll.u32 %v427, 16
    %v455 = vrot.slane %v453, 1
    %v456 = vor.u32 %v451, %v455
    %v458 = vshll.u32 %v433, 16
    %v460 = vrot.slane %v458, 1
    %v461 = vsel %vm434, %v456, %v460
    %v462 = vshrl.u32 %v433, 16
    %v464 = vor.u32 %v462, %v460
    %465 = vrot.lane.b32.xlu0 %v446, 28
    %v466 = vpop.permute.xlu0 %465
    %467 = vrot.lane.b32.xlu0 %v449, 28
    %v468 = vpop.permute.xlu0 %467
    %469 = vrot.lane.b32.xlu0 %v461, 28
    %v470 = vpop.permute.xlu0 %469
    %471 = vrot.lane.b32.xlu0 %v464, 28
    %v472 = vpop.permute.xlu0 %471
    %vm473 = vcmask 1046528
    %v474 = vrot.slane %v424, 1
    %v475 = vrot.slane %v430, 1
    %v476 = vsel %vm473, %v474, %v475
    %v477 = vrot.slane %v427, 1
    %v478 = vrot.slane %v433, 1
    %v479 = vsel %vm473, %v477, %v478
    %480 = vrot.lane.b32.xlu0 %v476, 56
    %v481 = vpop.permute.xlu0 %480
    %482 = vrot.lane.b32.xlu0 %v475, 56
    %v483 = vpop.permute.xlu0 %482
    %484 = vrot.lane.b32.xlu0 %v479, 56
    %v485 = vpop.permute.xlu0 %484
    %486 = vrot.lane.b32.xlu0 %v478, 56
    %v487 = vpop.permute.xlu0 %486
    %vm488 = vsmask.f32 6400
    %v489 = vrot.slane %v436, 1
    %v490 = vrot.slane %v438, 2
    %v491 = vor.u32 %v489, %v490
    %v492 = vrot.slane %v447, 1
    %v493 = vrot.slane %v443, 2
    %v494 = vor.u32 %v492, %v493
    %v495 = vsel %vm488, %v491, %v494
    %v496 = vrot.slane %v451, 1
    %v497 = vrot.slane %v453, 2
    %v498 = vor.u32 %v496, %v497
    %v499 = vrot.slane %v462, 1
    %v500 = vrot.slane %v458, 2
    %v501 = vor.u32 %v499, %v500
    %v502 = vsel %vm488, %v498, %v501
    %503 = vrot.lane.b32.xlu0 %v495, 84
    %v504 = vpop.permute.xlu0 %503
    %505 = vrot.lane.b32.xlu0 %v494, 84
    %v506 = vpop.permute.xlu0 %505
    %507 = vrot.lane.b32.xlu0 %v502, 84
    %v508 = vpop.permute.xlu0 %507
    %509 = vrot.lane.b32.xlu0 %v501, 84
    %v510 = vpop.permute.xlu0 %509
    %vm511 = vcmask 1045504
    %v512 = vrot.slane %v424, 2
    %v513 = vrot.slane %v430, 2
    %v514 = vsel %vm511, %v512, %v513
    %v515 = vrot.slane %v427, 2
    %v516 = vrot.slane %v433, 2
    %v517 = vsel %vm511, %v515, %v516
    %518 = vrot.lane.b32.xlu0 %v514, 112
    %v519 = vpop.permute.xlu0 %518
    %520 = vrot.lane.b32.xlu0 %v513, 112
    %v521 = vpop.permute.xlu0 %520
    %522 = vrot.lane.b32.xlu0 %v517, 112
    %v523 = vpop.permute.xlu0 %522
    %524 = vrot.lane.b32.xlu0 %v516, 112
    %v525 = vpop.permute.xlu0 %524
    %vm526 = vcmask 228352
    %v528 = vsel %vm526, %v424, %v466
    %v530 = vsel %vm526, %v430, %v468
    %v532 = vsel %vm526, %v427, %v470
    %v534 = vsel %vm526, %v433, %v472
    %vm535 = vcmask 457728
    %v537 = vsel %vm535, %v528, %v481
    %v539 = vsel %vm535, %v530, %v483
    %v541 = vsel %vm535, %v532, %v485
    %v543 = vsel %vm535, %v534, %v487
    %vm544 = vcmask 687104
    %v546 = vsel %vm544, %v537, %v504
    %v548 = vsel %vm544, %v539, %v506
    %v550 = vsel %vm544, %v541, %v508
    %v552 = vsel %vm544, %v543, %v510
    %vm553 = vcmask 916480
    %v555 = vsel %vm553, %v546, %v519
    %v557 = vsel %vm553, %v548, %v521
    %v559 = vsel %vm553, %v550, %v523
    %v561 = vsel %vm553, %v552, %v525
    %v566 = vunpack.c.l.b16 %v555
    %v567 = vunpack.c.l.b16 %v519
    %v568 = vunpack.c.h.b16 %v555
    %v569 = vunpack.c.h.b16 %v519
    %v570 = vunpack.c.l.b16 %v557
    %v571 = vunpack.c.l.b16 %v521
    %v572 = vunpack.c.l.b16 %v559
    %v573 = vunpack.c.l.b16 %v523
    %v574 = vunpack.c.h.b16 %v559
    %v575 = vunpack.c.h.b16 %v523
    %v576 = vunpack.c.l.b16 %v561
    %v577 = vunpack.c.l.b16 %v525
    %v578 = vld [vmem:[#allocation2] sm:$0xff]
    %v579 = vld [vmem:[#allocation2 + $0x8] sm:$0xff]
    %v580 = vld [vmem:[#allocation2 + $0x10] sm:$0xff]
    %v581 = vld [vmem:[#allocation2 + $0x18] sm:$0xff]
    %v582 = vld [vmem:[#allocation2 + $0x20] sm:$0xff]
    %v583 = vld [vmem:[#allocation2 + $0x28] sm:$0xff]
    %v584 = vld [vmem:[#allocation2 + $0x30] sm:$0xff]
    %v585 = vld [vmem:[#allocation2 + $0x38] sm:$0xff]
    %v586 = vld [vmem:[#allocation2 + $0x40] sm:$0xff]
    %v587 = vld [vmem:[#allocation2 + $0x48] sm:$0xff]
    %v588 = vld [vmem:[#allocation2 + $0x50] sm:$0xff]
    %v589 = vld [vmem:[#allocation2 + $0x58] sm:$0xff]
    %v590 = vld [vmem:[#allocation2 + $0x60] sm:$0xff]
    %v591 = vld [vmem:[#allocation2 + $0x68] sm:$0xff]
    %v592 = vld [vmem:[#allocation2 + $0x70] sm:$0xff]
    %v593 = vld [vmem:[#allocation2 + $0x78] sm:$0xff]
    %v594 = vld [vmem:[#allocation2 + $0x80] sm:$0xff]
    %v595 = vld [vmem:[#allocation2 + $0x88] sm:$0x33]
    %v596 = vld [vmem:[%s2] sm:$0x3]
    %v598 = vlaneseq
    %v599 = vshrl.u32 %v598, 7
    %v600 = vsub.s32 0, %v599
    %v601 = vrot.slane %v596, %v600
    %v602 = vlaneseq
    %v603 = vshrl.u32 %v602, 7
    %v604 = vsub.s32 1, %v603
    %v605 = vrot.slane %v596, %v604
    %v608 = vpack.c.b16 %v568, %v566
    %v609 = vpack.c.b16 %v569, %v567
    %v610 = vpack.c.b16 %v572, %v570
    %v611 = vpack.c.b16 %v573, %v571
    %v612 = vpack.c.b16 %v576, %v574
    %v613 = vpack.c.b16 %v577, %v575
    %v635 = vunpack.c.l.b16 %v578
    %v636 = vunpack.c.h.b16 %v578
    %v637 = vunpack.c.l.b16 %v579
    %v638 = vunpack.c.h.b16 %v579
    %v639 = vunpack.c.l.b16 %v580
    %v640 = vunpack.c.h.b16 %v580
    %v641 = vunpack.c.l.b16 %v581
    %v642 = vunpack.c.h.b16 %v581
    %v643 = vunpack.c.l.b16 %v582
    %v644 = vunpack.c.h.b16 %v582
    %v645 = vunpack.c.l.b16 %v583
    %v646 = vunpack.c.h.b16 %v583
    %v647 = vunpack.c.l.b16 %v584
    %v648 = vunpack.c.h.b16 %v584
    %v649 = vunpack.c.l.b16 %v585
    %v650 = vunpack.c.h.b16 %v585
    %v651 = vunpack.c.l.b16 %v586
    %v652 = vunpack.c.h.b16 %v586
    %v653 = vunpack.c.l.b16 %v587
    %v654 = vunpack.c.h.b16 %v587
    %v655 = vunpack.c.l.b16 %v588
    %v656 = vunpack.c.h.b16 %v588
    %v657 = vunpack.c.l.b16 %v589
    %v658 = vunpack.c.h.b16 %v589
    %v659 = vunpack.c.l.b16 %v590
    %v660 = vunpack.c.h.b16 %v590
    %v661 = vunpack.c.l.b16 %v591
    %v662 = vunpack.c.h.b16 %v591
    %v663 = vunpack.c.l.b16 %v592
    %v664 = vunpack.c.h.b16 %v592
    %v665 = vunpack.c.l.b16 %v593
    %v666 = vunpack.c.h.b16 %v593
    %v667 = vunpack.c.l.b16 %v594
    %v668 = vunpack.c.h.b16 %v594
    %v669 = vunpack.c.l.b16 %v595
    %v670 = vunpack.c.h.b16 %v595
    %v671 = vpack.c.b16 %v637, %v635
    %v672 = vpack.c.b16 %v638, %v636
    %v673 = vpack.c.b16 %v641, %v639
    %v674 = vpack.c.b16 %v642, %v640
    %v675 = vpack.c.b16 %v645, %v643
    %v676 = vpack.c.b16 %v646, %v644
    %v677 = vpack.c.b16 %v649, %v647
    %v678 = vpack.c.b16 %v650, %v648
    %v679 = vpack.c.b16 %v653, %v651
    %v680 = vpack.c.b16 %v654, %v652
    %v681 = vpack.c.b16 %v657, %v655
    %v682 = vpack.c.b16 %v658, %v656
    %v683 = vpack.c.b16 %v661, %v659
    %v684 = vpack.c.b16 %v662, %v660
    %v685 = vpack.c.b16 %v665, %v663
    %v686 = vpack.c.b16 %v666, %v664
    %v687 = vpack.c.b16 %v669, %v667
    %v688 = vpack.c.b16 %v670, %v668
    %vm705 = vcmask 97280
    %v707 = vsel %vm705, %v609, 0
    %v710 = vsel %vm705, %v611, 0
    %v713 = vsel %vm705, %v613, 0
    %vm715 = vcmask 1045504
    %v717 = vsel %vm715, %v687, 0
    %v720 = vsel %vm715, %v688, 0
    %722 = vmatprep.subr.bf16.mxu0 %v672
    %723 = vmatpush1.bf16.msra.mxu0 %v671
    %724 = vmatprep.subr.bf16.mxu0 %v674
    %725 = vmatpush1.bf16.msra.mxu0 %v673
    %726 = vmatprep.subr.bf16.mxu0 %v676
    %727 = vmatpush1.bf16.msra.mxu0 %v675
    %728 = vmatprep.subr.bf16.mxu0 %v678
    %729 = vmatpush1.bf16.msra.mxu0 %v677
    %730 = vmatprep.subr.bf16.mxu0 %v680
    %731 = vmatpush1.bf16.msra.mxu0 %v679
    %732 = vmatprep.subr.bf16.mxu0 %v682
    %733 = vmatpush1.bf16.msra.mxu0 %v681
    %734 = vmatprep.subr.bf16.mxu0 %v684
    %735 = vmatpush1.bf16.msra.mxu0 %v683
    %736 = vmatprep.subr.bf16.mxu0 %v686
    %737 = vmatpush1.bf16.msra.mxu0 %v685
    %738 = vmatprep.subr.bf16.mxu0 %v720
    %739 = vmatpush1.bf16.msra.mxu0 %v717
    %740 = vmatprep.subr.bf16.mxu0 0
    %741 = vmatpush1.bf16.msra.mxu0 0
    %742 = vmatprep.subr.bf16.mxu0 0
    %743 = vmatpush1.bf16.msra.mxu0 0
    %744 = vmatprep.subr.bf16.mxu0 0
    %745 = vmatpush1.bf16.msra.mxu0 0
    %746 = vmatprep.subr.bf16.mxu0 0
    %747 = vmatpush1.bf16.msra.mxu0 0
    %748 = vmatprep.subr.bf16.mxu0 0
    %749 = vmatpush1.bf16.msra.mxu0 0
    %750 = vmatprep.subr.bf16.mxu0 0
    %751 = vmatpush1.bf16.msra.mxu0 0
    %752 = vmatprep.subr.bf16.mxu0 0
    %753 = vmatpush1.bf16.msra.mxu0 0
    %754 = vmatprep.mubr.bf16.mxu0 %v707
    %755 = vmatmul.mubr.bf16.gmra.mrb[0].mxu0 %v608
    %v756 = vpop.f32.mrb[0].mxu0
    %v757 = vadd.f32 %v601, %v756
    %v758 = vpop.f32.mrb[0].mxu0
    %v759 = vadd.f32 %v605, %v758
    %v760 = vpop.f32.mrb[0].mxu0
    %v761 = vadd.f32 %v601, %v760
    %v762 = vpop.f32.mrb[0].mxu0
    %v763 = vadd.f32 %v605, %v762
    %764 = vmatprep.mubr.bf16.mxu0 %v710
    %765 = vmatmul.mubr.bf16.gmra.mrb[0].mxu0 %v610
    %v766 = vpop.f32.mrb[0].mxu0
    %v767 = vadd.f32 %v601, %v766
    %v768 = vpop.f32.mrb[0].mxu0
    %v769 = vadd.f32 %v605, %v768
    %v770 = vpop.f32.mrb[0].mxu0
    %v771 = vadd.f32 %v601, %v770
    %v772 = vpop.f32.mrb[0].mxu0
    %v773 = vadd.f32 %v605, %v772
    %774 = vmatprep.mubr.bf16.mxu0 %v713
    %775 = vmatmul.mubr.bf16.gmra.mrb[0].mxu0 %v612
    %v776 = vpop.f32.mrb[0].mxu0
    %v777 = vadd.f32 %v601, %v776
    %v778 = vpop.f32.mrb[0].mxu0
    %v779 = vadd.f32 %v605, %v778
    %v780 = vpop.f32.mrb[0].mxu0
    %v781 = vadd.f32 %v601, %v780
    %v782 = vpop.f32.mrb[0].mxu0
    %v783 = vadd.f32 %v605, %v782
    %784 = vdwg.mxu0
    %v785 = vmax.f32 %v757, 0.0
    %v786 = vmax.f32 %v759, 0.0
    %v787 = vmax.f32 %v761, 0.0
    %v788 = vmax.f32 %v763, 0.0
    %v789 = vmax.f32 %v767, 0.0
    %v790 = vmax.f32 %v769, 0.0
    %v791 = vmax.f32 %v771, 0.0
    %v792 = vmax.f32 %v773, 0.0
    %v793 = vmax.f32 %v777, 0.0
    %v794 = vmax.f32 %v779, 0.0
    %v795 = vmax.f32 %v781, 0.0
    %v796 = vmax.f32 %v783, 0.0
    %809 = vrot.lane.b32.xlu0 %v785, 56
    %v810 = vpop.permute.xlu0 %809
    %811 = vrot.lane.b32.xlu0 %v786, 56
    %v812 = vpop.permute.xlu0 %811
    %813 = vrot.lane.b32.xlu0 %v787, 56
    %v814 = vpop.permute.xlu0 %813
    %815 = vrot.lane.b32.xlu0 %v788, 56
    %v816 = vpop.permute.xlu0 %815
    %817 = vrot.lane.b32.xlu0 %v789, 56
    %v818 = vpop.permute.xlu0 %817
    %819 = vrot.lane.b32.xlu0 %v790, 56
    %v820 = vpop.permute.xlu0 %819
    %821 = vrot.lane.b32.xlu0 %v791, 56
    %v822 = vpop.permute.xlu0 %821
    %823 = vrot.lane.b32.xlu0 %v792, 56
    %v824 = vpop.permute.xlu0 %823
    %825 = vrot.lane.b32.xlu0 %v793, 56
    %v826 = vpop.permute.xlu0 %825
    %827 = vrot.lane.b32.xlu0 %v794, 56
    %v828 = vpop.permute.xlu0 %827
    %829 = vrot.lane.b32.xlu0 %v795, 56
    %v830 = vpop.permute.xlu0 %829
    %831 = vrot.lane.b32.xlu0 %v796, 56
    %v832 = vpop.permute.xlu0 %831
    %v833 = vsel %vm535, %v810, %v812
    %v834 = vsel %vm535, %v814, %v816
    %v835 = vsel %vm535, %v818, %v820
    %v836 = vsel %vm535, %v822, %v824
    %v837 = vsel %vm535, %v826, %v828
    %v838 = vsel %vm535, %v830, %v832
    %v845 = vmax.f32 %v785, %v833
    %v846 = vmax.f32 %v787, %v834
    %v847 = vmax.f32 %v789, %v835
    %v848 = vmax.f32 %v791, %v836
    %v849 = vmax.f32 %v793, %v837
    %v850 = vmax.f32 %v795, %v838
    %v857 = vcombine.high %v845, %v845
    %v859 = vunpack.c.l.s4 1983009808
    %v860 = vunpack.c.0.s8 %v859
    %v861 = vlaneseq
    %v862 = vshrl.u32 %v861, 7
    %v863 = vsub.s32 %v860, %v862
    %v864 = vrot.slane %v845, %v863
    %v866 = vunpack.c.l.s4 1983009808
    %v867 = vunpack.c.0.s8 %v866
    %v868 = vlaneseq
    %v869 = vshrl.u32 %v868, 7
    %v870 = vsub.s32 %v867, %v869
    %v871 = vrot.slane %v857, %v870
    %v872 = vcombine.high %v864, %v864
    %v873 = vcombine.high %v871, %v871
    %v874 = vcombine.high %v846, %v846
    %v876 = vunpack.c.l.s4 1983009808
    %v877 = vunpack.c.0.s8 %v876
    %v878 = vlaneseq
    %v879 = vshrl.u32 %v878, 7
    %v880 = vsub.s32 %v877, %v879
    %v881 = vrot.slane %v846, %v880
    %v883 = vunpack.c.l.s4 1983009808
    %v884 = vunpack.c.0.s8 %v883
    %v885 = vlaneseq
    %v886 = vshrl.u32 %v885, 7
    %v887 = vsub.s32 %v884, %v886
    %v888 = vrot.slane %v874, %v887
    %v889 = vcombine.high %v881, %v881
    %v890 = vcombine.high %v888, %v888
    %v891 = vcombine.high %v847, %v847
    %v893 = vunpack.c.l.s4 1983009808
    %v894 = vunpack.c.0.s8 %v893
    %v895 = vlaneseq
    %v896 = vshrl.u32 %v895, 7
    %v897 = vsub.s32 %v894, %v896
    %v898 = vrot.slane %v847, %v897
    %v900 = vunpack.c.l.s4 1983009808
    %v901 = vunpack.c.0.s8 %v900
    %v902 = vlaneseq
    %v903 = vshrl.u32 %v902, 7
    %v904 = vsub.s32 %v901, %v903
    %v905 = vrot.slane %v891, %v904
    %v906 = vcombine.high %v898, %v898
    %v907 = vcombine.high %v905, %v905
    %v908 = vcombine.high %v848, %v848
    %v910 = vunpack.c.l.s4 1983009808
    %v911 = vunpack.c.0.s8 %v910
    %v912 = vlaneseq
    %v913 = vshrl.u32 %v912, 7
    %v914 = vsub.s32 %v911, %v913
    %v915 = vrot.slane %v848, %v914
    %v917 = vunpack.c.l.s4 1983009808
    %v918 = vunpack.c.0.s8 %v917
    %v919 = vlaneseq
    %v920 = vshrl.u32 %v919, 7
    %v921 = vsub.s32 %v918, %v920
    %v922 = vrot.slane %v908, %v921
    %v923 = vcombine.high %v915, %v915
    %v924 = vcombine.high %v922, %v922
    %v925 = vcombine.high %v849, %v849
    %v927 = vunpack.c.l.s4 1983009808
    %v928 = vunpack.c.0.s8 %v927
    %v929 = vlaneseq
    %v930 = vshrl.u32 %v929, 7
    %v931 = vsub.s32 %v928, %v930
    %v932 = vrot.slane %v849, %v931
    %v934 = vunpack.c.l.s4 1983009808
    %v935 = vunpack.c.0.s8 %v934
    %v936 = vlaneseq
    %v937 = vshrl.u32 %v936, 7
    %v938 = vsub.s32 %v935, %v937
    %v939 = vrot.slane %v925, %v938
    %v940 = vcombine.high %v932, %v932
    %v941 = vcombine.high %v939, %v939
    %v942 = vcombine.high %v850, %v850
    %v944 = vunpack.c.l.s4 1983009808
    %v945 = vunpack.c.0.s8 %v944
    %v946 = vlaneseq
    %v947 = vshrl.u32 %v946, 7
    %v948 = vsub.s32 %v945, %v947
    %v949 = vrot.slane %v850, %v948
    %v951 = vunpack.c.l.s4 1983009808
    %v952 = vunpack.c.0.s8 %v951
    %v953 = vlaneseq
    %v954 = vshrl.u32 %v953, 7
    %v955 = vsub.s32 %v952, %v954
    %v956 = vrot.slane %v942, %v955
    %v957 = vcombine.high %v949, %v949
    %v958 = vcombine.high %v956, %v956
    %vm983 = vcmask 582656
    %v984 = vsel %vm983, %v864, -inf
    %v985 = vrot.slane %v984, 4
    %v986 = vmax.f32 %v984, %v985
    %v987 = vrot.slane %v986, 2
    %v988 = vmax.f32 %v986, %v987
    %v989 = vrot.slane %v988, 1
    %v990 = vmax.f32 %v988, %v989
    %v991 = vsel %vm983, %v872, -inf
    %v992 = vrot.slane %v991, 4
    %v993 = vmax.f32 %v991, %v992
    %v994 = vrot.slane %v993, 2
    %v995 = vmax.f32 %v993, %v994
    %v996 = vrot.slane %v995, 1
    %v997 = vmax.f32 %v995, %v996
    %v998 = vsel %vm983, %v871, -inf
    %v999 = vrot.slane %v998, 4
    %v1000 = vmax.f32 %v998, %v999
    %v1001 = vrot.slane %v1000, 2
    %v1002 = vmax.f32 %v1000, %v1001
    %v1003 = vrot.slane %v1002, 1
    %v1004 = vmax.f32 %v1002, %v1003
    %v1005 = vsel %vm983, %v873, -inf
    %v1006 = vrot.slane %v1005, 4
    %v1007 = vmax.f32 %v1005, %v1006
    %v1008 = vrot.slane %v1007, 2
    %v1009 = vmax.f32 %v1007, %v1008
    %v1010 = vrot.slane %v1009, 1
    %v1011 = vmax.f32 %v1009, %v1010
    %v1012 = vsel %vm983, %v881, -inf
    %v1013 = vrot.slane %v1012, 4
    %v1014 = vmax.f32 %v1012, %v1013
    %v1015 = vrot.slane %v1014, 2
    %v1016 = vmax.f32 %v1014, %v1015
    %v1017 = vrot.slane %v1016, 1
    %v1018 = vmax.f32 %v1016, %v1017
    %v1019 = vsel %vm983, %v889, -inf
    %v1020 = vrot.slane %v1019, 4
    %v1021 = vmax.f32 %v1019, %v1020
    %v1022 = vrot.slane %v1021, 2
    %v1023 = vmax.f32 %v1021, %v1022
    %v1024 = vrot.slane %v1023, 1
    %v1025 = vmax.f32 %v1023, %v1024
    %v1026 = vsel %vm983, %v888, -inf
    %v1027 = vrot.slane %v1026, 4
    %v1028 = vmax.f32 %v1026, %v1027
    %v1029 = vrot.slane %v1028, 2
    %v1030 = vmax.f32 %v1028, %v1029
    %v1031 = vrot.slane %v1030, 1
    %v1032 = vmax.f32 %v1030, %v1031
    %v1033 = vsel %vm983, %v890, -inf
    %v1034 = vrot.slane %v1033, 4
    %v1035 = vmax.f32 %v1033, %v1034
    %v1036 = vrot.slane %v1035, 2
    %v1037 = vmax.f32 %v1035, %v1036
    %v1038 = vrot.slane %v1037, 1
    %v1039 = vmax.f32 %v1037, %v1038
    %v1040 = vsel %vm983, %v898, -inf
    %v1041 = vrot.slane %v1040, 4
    %v1042 = vmax.f32 %v1040, %v1041
    %v1043 = vrot.slane %v1042, 2
    %v1044 = vmax.f32 %v1042, %v1043
    %v1045 = vrot.slane %v1044, 1
    %v1046 = vmax.f32 %v1044, %v1045
    %v1047 = vsel %vm983, %v906, -inf
    %v1048 = vrot.slane %v1047, 4
    %v1049 = vmax.f32 %v1047, %v1048
    %v1050 = vrot.slane %v1049, 2
    %v1051 = vmax.f32 %v1049, %v1050
    %v1052 = vrot.slane %v1051, 1
    %v1053 = vmax.f32 %v1051, %v1052
    %v1054 = vsel %vm983, %v905, -inf
    %v1055 = vrot.slane %v1054, 4
    %v1056 = vmax.f32 %v1054, %v1055
    %v1057 = vrot.slane %v1056, 2
    %v1058 = vmax.f32 %v1056, %v1057
    %v1059 = vrot.slane %v1058, 1
    %v1060 = vmax.f32 %v1058, %v1059
    %v1061 = vsel %vm983, %v907, -inf
    %v1062 = vrot.slane %v1061, 4
    %v1063 = vmax.f32 %v1061, %v1062
    %v1064 = vrot.slane %v1063, 2
    %v1065 = vmax.f32 %v1063, %v1064
    %v1066 = vrot.slane %v1065, 1
    %v1067 = vmax.f32 %v1065, %v1066
    %v1068 = vsel %vm983, %v915, -inf
    %v1069 = vrot.slane %v1068, 4
    %v1070 = vmax.f32 %v1068, %v1069
    %v1071 = vrot.slane %v1070, 2
    %v1072 = vmax.f32 %v1070, %v1071
    %v1073 = vrot.slane %v1072, 1
    %v1074 = vmax.f32 %v1072, %v1073
    %v1075 = vsel %vm983, %v923, -inf
    %v1076 = vrot.slane %v1075, 4
    %v1077 = vmax.f32 %v1075, %v1076
    %v1078 = vrot.slane %v1077, 2
    %v1079 = vmax.f32 %v1077, %v1078
    %v1080 = vrot.slane %v1079, 1
    %v1081 = vmax.f32 %v1079, %v1080
    %v1082 = vsel %vm983, %v922, -inf
    %v1083 = vrot.slane %v1082, 4
    %v1084 = vmax.f32 %v1082, %v1083
    %v1085 = vrot.slane %v1084, 2
    %v1086 = vmax.f32 %v1084, %v1085
    %v1087 = vrot.slane %v1086, 1
    %v1088 = vmax.f32 %v1086, %v1087
    %v1089 = vsel %vm983, %v924, -inf
    %v1090 = vrot.slane %v1089, 4
    %v1091 = vmax.f32 %v1089, %v1090
    %v1092 = vrot.slane %v1091, 2
    %v1093 = vmax.f32 %v1091, %v1092
    %v1094 = vrot.slane %v1093, 1
    %v1095 = vmax.f32 %v1093, %v1094
    %v1096 = vsel %vm983, %v932, -inf
    %v1097 = vrot.slane %v1096, 4
    %v1098 = vmax.f32 %v1096, %v1097
    %v1099 = vrot.slane %v1098, 2
    %v1100 = vmax.f32 %v1098, %v1099
    %v1101 = vrot.slane %v1100, 1
    %v1102 = vmax.f32 %v1100, %v1101
    %v1103 = vsel %vm983, %v940, -inf
    %v1104 = vrot.slane %v1103, 4
    %v1105 = vmax.f32 %v1103, %v1104
    %v1106 = vrot.slane %v1105, 2
    %v1107 = vmax.f32 %v1105, %v1106
    %v1108 = vrot.slane %v1107, 1
    %v1109 = vmax.f32 %v1107, %v1108
    %v1110 = vsel %vm983, %v939, -inf
    %v1111 = vrot.slane %v1110, 4
    %v1112 = vmax.f32 %v1110, %v1111
    %v1113 = vrot.slane %v1112, 2
    %v1114 = vmax.f32 %v1112, %v1113
    %v1115 = vrot.slane %v1114, 1
    %v1116 = vmax.f32 %v1114, %v1115
    %v1117 = vsel %vm983, %v941, -inf
    %v1118 = vrot.slane %v1117, 4
    %v1119 = vmax.f32 %v1117, %v1118
    %v1120 = vrot.slane %v1119, 2
    %v1121 = vmax.f32 %v1119, %v1120
    %v1122 = vrot.slane %v1121, 1
    %v1123 = vmax.f32 %v1121, %v1122
    %v1124 = vsel %vm983, %v949, -inf
    %v1125 = vrot.slane %v1124, 4
    %v1126 = vmax.f32 %v1124, %v1125
    %v1127 = vrot.slane %v1126, 2
    %v1128 = vmax.f32 %v1126, %v1127
    %v1129 = vrot.slane %v1128, 1
    %v1130 = vmax.f32 %v1128, %v1129
    %v1131 = vsel %vm983, %v957, -inf
    %v1132 = vrot.slane %v1131, 4
    %v1133 = vmax.f32 %v1131, %v1132
    %v1134 = vrot.slane %v1133, 2
    %v1135 = vmax.f32 %v1133, %v1134
    %v1136 = vrot.slane %v1135, 1
    %v1137 = vmax.f32 %v1135, %v1136
    %v1138 = vsel %vm983, %v956, -inf
    %v1139 = vrot.slane %v1138, 4
    %v1140 = vmax.f32 %v1138, %v1139
    %v1141 = vrot.slane %v1140, 2
    %v1142 = vmax.f32 %v1140, %v1141
    %v1143 = vrot.slane %v1142, 1
    %v1144 = vmax.f32 %v1142, %v1143
    %v1145 = vsel %vm983, %v958, -inf
    %v1146 = vrot.slane %v1145, 4
    %v1147 = vmax.f32 %v1145, %v1146
    %v1148 = vrot.slane %v1147, 2
    %v1149 = vmax.f32 %v1147, %v1148
    %v1150 = vrot.slane %v1149, 1
    %v1151 = vmax.f32 %v1149, %v1150
    %v1152 = vpack.c.bf16 %v990, %v990
    %v1153 = vpack.c.bf16 %v997, %v997
    %v1154 = vpack.c.bf16 %v1004, %v1004
    %v1155 = vpack.c.bf16 %v1011, %v1011
    %v1156 = vpack.c.bf16 %v1018, %v1018
    %v1157 = vpack.c.bf16 %v1025, %v1025
    %v1158 = vpack.c.bf16 %v1032, %v1032
    %v1159 = vpack.c.bf16 %v1039, %v1039
    %v1160 = vpack.c.bf16 %v1046, %v1046
    %v1161 = vpack.c.bf16 %v1053, %v1053
    %v1162 = vpack.c.bf16 %v1060, %v1060
    %v1163 = vpack.c.bf16 %v1067, %v1067
    %v1164 = vpack.c.bf16 %v1074, %v1074
    %v1165 = vpack.c.bf16 %v1081, %v1081
    %v1166 = vpack.c.bf16 %v1088, %v1088
    %v1167 = vpack.c.bf16 %v1095, %v1095
    %v1168 = vpack.c.bf16 %v1102, %v1102
    %v1169 = vpack.c.bf16 %v1109, %v1109
    %v1170 = vpack.c.bf16 %v1116, %v1116
    %v1171 = vpack.c.bf16 %v1123, %v1123
    %v1172 = vpack.c.bf16 %v1130, %v1130
    %v1173 = vpack.c.bf16 %v1137, %v1137
    %v1174 = vpack.c.bf16 %v1144, %v1144
    %v1175 = vpack.c.bf16 %v1151, %v1151
    %v1192 = vunpack.c.l.b16 %v1152
    %v1193 = vunpack.c.l.b16 %v1153
    %v1194 = vunpack.c.l.b16 %v1154
    %v1195 = vunpack.c.l.b16 %v1155
    %v1196 = vunpack.c.l.b16 %v1156
    %v1197 = vunpack.c.l.b16 %v1157
    %v1198 = vunpack.c.l.b16 %v1158
    %v1199 = vunpack.c.l.b16 %v1159
    %v1200 = vunpack.c.l.b16 %v1164
    %v1201 = vunpack.c.l.b16 %v1165
    %v1202 = vunpack.c.l.b16 %v1166
    %v1203 = vunpack.c.l.b16 %v1167
    %v1204 = vunpack.c.l.b16 %v1168
    %v1205 = vunpack.c.l.b16 %v1169
    %v1206 = vunpack.c.l.b16 %v1170
    %v1207 = vunpack.c.l.b16 %v1171
    %vm1208 = vcmask 1041409
    %v1209 = vsel %vm1208, %v1193, %v1192
    %vm1210 = vcmask 1042434
    %v1211 = vsel %vm1210, %v1194, %v1209
    %vm1212 = vcmask 1043459
    %v1213 = vsel %vm1212, %v1195, %v1211
    %vm1214 = vcmask 1044484
    %v1215 = vsel %vm1214, %v1196, %v1213
    %vm1216 = vcmask 1045509
    %v1217 = vsel %vm1216, %v1197, %v1215
    %vm1218 = vcmask 1046534
    %v1219 = vsel %vm1218, %v1198, %v1217
    %vm1220 = vcmask 1047559
    %v1221 = vsel %vm1220, %v1199, %v1219
    %v1222 = vsel %vm1208, %v1201, %v1200
    %v1223 = vsel %vm1210, %v1202, %v1222
    %v1224 = vsel %vm1212, %v1203, %v1223
    %v1225 = vsel %vm1214, %v1204, %v1224
    %v1226 = vsel %vm1216, %v1205, %v1225
    %v1227 = vsel %vm1218, %v1206, %v1226
    %v1228 = vsel %vm1220, %v1207, %v1227
    %v1229 = vpack.c.b16 %v1221, %v1221
    %v1230 = vpack.c.b16 %v1228, %v1228
    %v1233 = vunpack.c.l.b16 %v1160
    %v1234 = vunpack.c.l.b16 %v1172
    %v1235 = vsel %vm1208, %v1194, %v1193
    %v1236 = vsel %vm1210, %v1195, %v1235
    %v1237 = vsel %vm1212, %v1196, %v1236
    %v1238 = vsel %vm1214, %v1197, %v1237
    %v1239 = vsel %vm1216, %v1198, %v1238
    %v1240 = vsel %vm1218, %v1199, %v1239
    %v1241 = vsel %vm1220, %v1233, %v1240
    %v1242 = vsel %vm1208, %v1202, %v1201
    %v1243 = vsel %vm1210, %v1203, %v1242
    %v1244 = vsel %vm1212, %v1204, %v1243
    %v1245 = vsel %vm1214, %v1205, %v1244
    %v1246 = vsel %vm1216, %v1206, %v1245
    %v1247 = vsel %vm1218, %v1207, %v1246
    %v1248 = vsel %vm1220, %v1234, %v1247
    %v1249 = vpack.c.b16 %v1241, %v1241
    %v1250 = vpack.c.b16 %v1248, %v1248
    %1251 = vrot.lane.b32.xlu0 %v1249, 72
    %v1252 = vpop.permute.xlu0 %1251
    %1253 = vrot.lane.b32.xlu0 %v1250, 72
    %v1254 = vpop.permute.xlu0 %1253
    %v1257 = vunpack.c.l.b16 %v1161
    %v1258 = vunpack.c.l.b16 %v1173
    %v1259 = vsel %vm1208, %v1195, %v1194
    %v1260 = vsel %vm1210, %v1196, %v1259
    %v1261 = vsel %vm1212, %v1197, %v1260
    %v1262 = vsel %vm1214, %v1198, %v1261
    %v1263 = vsel %vm1216, %v1199, %v1262
    %v1264 = vsel %vm1218, %v1233, %v1263
    %v1265 = vsel %vm1220, %v1257, %v1264
    %v1266 = vsel %vm1208, %v1203, %v1202
    %v1267 = vsel %vm1210, %v1204, %v1266
    %v1268 = vsel %vm1212, %v1205, %v1267
    %v1269 = vsel %vm1214, %v1206, %v1268
    %v1270 = vsel %vm1216, %v1207, %v1269
    %v1271 = vsel %vm1218, %v1234, %v1270
    %v1272 = vsel %vm1220, %v1258, %v1271
    %v1273 = vpack.c.b16 %v1265, %v1265
    %v1274 = vpack.c.b16 %v1272, %v1272
    %1275 = vrot.lane.b32.xlu0 %v1273, 16
    %v1276 = vpop.permute.xlu0 %1275
    %1277 = vrot.lane.b32.xlu0 %v1274, 16
    %v1278 = vpop.permute.xlu0 %1277
    %v1281 = vunpack.c.l.b16 %v1162
    %v1282 = vunpack.c.l.b16 %v1174
    %v1283 = vsel %vm1208, %v1196, %v1195
    %v1284 = vsel %vm1210, %v1197, %v1283
    %v1285 = vsel %vm1212, %v1198, %v1284
    %v1286 = vsel %vm1214, %v1199, %v1285
    %v1287 = vsel %vm1216, %v1233, %v1286
    %v1288 = vsel %vm1218, %v1257, %v1287
    %v1289 = vsel %vm1220, %v1281, %v1288
    %v1290 = vsel %vm1208, %v1204, %v1203
    %v1291 = vsel %vm1210, %v1205, %v1290
    %v1292 = vsel %vm1212, %v1206, %v1291
    %v1293 = vsel %vm1214, %v1207, %v1292
    %v1294 = vsel %vm1216, %v1234, %v1293
    %v1295 = vsel %vm1218, %v1258, %v1294
    %v1296 = vsel %vm1220, %v1282, %v1295
    %v1297 = vpack.c.b16 %v1289, %v1289
    %v1298 = vpack.c.b16 %v1296, %v1296
    %1299 = vrot.lane.b32.xlu0 %v1297, 88
    %v1300 = vpop.permute.xlu0 %1299
    %1301 = vrot.lane.b32.xlu0 %v1298, 88
    %v1302 = vpop.permute.xlu0 %1301
    %v1305 = vunpack.c.l.b16 %v1163
    %v1306 = vunpack.c.l.b16 %v1175
    %v1307 = vsel %vm1208, %v1197, %v1196
    %v1308 = vsel %vm1210, %v1198, %v1307
    %v1309 = vsel %vm1212, %v1199, %v1308
    %v1310 = vsel %vm1214, %v1233, %v1309
    %v1311 = vsel %vm1216, %v1257, %v1310
    %v1312 = vsel %vm1218, %v1281, %v1311
    %v1313 = vsel %vm1220, %v1305, %v1312
    %v1314 = vsel %vm1208, %v1205, %v1204
    %v1315 = vsel %vm1210, %v1206, %v1314
    %v1316 = vsel %vm1212, %v1207, %v1315
    %v1317 = vsel %vm1214, %v1234, %v1316
    %v1318 = vsel %vm1216, %v1258, %v1317
    %v1319 = vsel %vm1218, %v1282, %v1318
    %v1320 = vsel %vm1220, %v1306, %v1319
    %v1321 = vpack.c.b16 %v1313, %v1313
    %v1322 = vpack.c.b16 %v1320, %v1320
    %1323 = vrot.lane.b32.xlu0 %v1321, 32
    %v1324 = vpop.permute.xlu0 %1323
    %1325 = vrot.lane.b32.xlu0 %v1322, 32
    %v1326 = vpop.permute.xlu0 %1325
    %vm1327 = vcmask 588800
    %v1330 = vsel %vm1327, %v1229, %v1252
    %v1333 = vsel %vm1327, %v1230, %v1254
    %vm1334 = vcmask 130048
    %v1336 = vsel %vm1334, %v1252, %v1276
    %v1338 = vsel %vm1334, %v1254, %v1278
    %vm1339 = vcmask 719872
    %v1341 = vsel %vm1339, %v1336, %v1300
    %v1343 = vsel %vm1339, %v1338, %v1302
    %vm1344 = vcmask 261120
    %v1346 = vsel %vm1344, %v1300, %v1324
    %v1348 = vsel %vm1344, %v1302, %v1326
    %v1355 = vunpack.c.l.b16 %v1330
    %v1356 = vunpack.c.l.b16 %v1341
    %v1357 = vunpack.c.l.b16 %v1346
    %v1358 = vunpack.c.l.b16 %v1333
    %v1359 = vunpack.c.l.b16 %v1343
    %v1360 = vunpack.c.l.b16 %v1348
    %v1361 = vld [vmem:[%s3] sm:$0xf]
    %v1362 = vld [vmem:[%s3 + $0x4] sm:$0xf]
    %v1363 = vld [vmem:[%s3 + $0x8] sm:$0xf]
    %v1364 = vld [vmem:[%s3 + $0xc] sm:$0xf]
    %v1365 = vld [vmem:[%s3 + $0x10] sm:$0xf]
    %v1366 = vld [vmem:[%s3 + $0x14] sm:$0xf]
    %v1367 = vld [vmem:[%s3 + $0x18] sm:$0xf]
    %v1368 = vld [vmem:[%s3 + $0x1c] sm:$0xf]
    %v1369 = vld [vmem:[%s3 + $0x20] sm:$0xf]
    %v1370 = vld [vmem:[%s3 + $0x24] sm:$0xf]
    %v1371 = vld [vmem:[%s3 + $0x28] sm:$0xf]
    %v1372 = vld [vmem:[%s3 + $0x2c] sm:$0xf]
    %v1373 = vld [vmem:[%s3 + $0x30] sm:$0xf]
    %v1374 = vld [vmem:[%s3 + $0x34] sm:$0xf]
    %v1375 = vld [vmem:[%s3 + $0x38] sm:$0xf]
    %v1376 = vld [vmem:[%s3 + $0x3c] sm:$0xf]
    %v1377 = vld [vmem:[%s3 + $0x40] sm:$0xf]
    %v1378 = vld [vmem:[%s3 + $0x44] sm:$0xf]
    %v1379 = vld [vmem:[%s3 + $0x48] sm:$0xf]
    %v1380 = vld [vmem:[%s3 + $0x4c] sm:$0xf]
    %v1381 = vld [vmem:[%s3 + $0x50] sm:$0xf]
    %v1382 = vld [vmem:[%s3 + $0x54] sm:$0xf]
    %v1383 = vld [vmem:[%s3 + $0x58] sm:$0xf]
    %v1384 = vld [vmem:[%s3 + $0x5c] sm:$0xf]
    %v1385 = vld [vmem:[%s3 + $0x60] sm:$0xf]
    %v1386 = vld [vmem:[%s3 + $0x64] sm:$0xf]
    %v1387 = vld [vmem:[%s3 + $0x68] sm:$0xf]
    %v1388 = vld [vmem:[%s3 + $0x6c] sm:$0xf]
    %v1389 = vld [vmem:[%s3 + $0x70] sm:$0xf]
    %v1390 = vld [vmem:[%s3 + $0x74] sm:$0xf]
    %v1391 = vld [vmem:[%s3 + $0x78] sm:$0xf]
    %v1392 = vld [vmem:[%s3 + $0x7c] sm:$0xf]
    %v1393 = vld [vmem:[%s3 + $0x80] sm:$0xf]
    %v1394 = vld [vmem:[%s3 + $0x84] sm:$0xf]
    %v1395 = vld [vmem:[%s3 + $0x88] sm:$0xf]
    %v1396 = vld [vmem:[%s3 + $0x8c] sm:$0xf]
    %v1397 = vld [vmem:[%s3 + $0x90] sm:$0xf]
    %v1398 = vld [vmem:[%s3 + $0x94] sm:$0xf]
    %v1399 = vld [vmem:[%s3 + $0x98] sm:$0xf]
    %v1400 = vld [vmem:[%s3 + $0x9c] sm:$0xf]
    %v1401 = vld [vmem:[%s3 + $0xa0] sm:$0xf]
    %v1402 = vld [vmem:[%s3 + $0xa4] sm:$0xf]
    %v1403 = vld [vmem:[%s3 + $0xa8] sm:$0xf]
    %v1404 = vld [vmem:[%s3 + $0xac] sm:$0xf]
    %v1405 = vld [vmem:[%s3 + $0xb0] sm:$0xf]
    %v1406 = vld [vmem:[%s4] sm:$0x1]
    %v1408 = vlaneseq
    %v1409 = vshrl.u32 %v1408, 7
    %v1410 = vsub.s32 0, %v1409
    %v1411 = vrot.slane %v1406, %v1410
    %v1413 = vpack.c.b16 %v1358, %v1355
    %v1414 = vpack.c.b16 %v1359, %v1356
    %v1415 = vpack.c.b16 %v1360, %v1357
    %v1463 = vunpack.c.l.b16 %v1361
    %v1464 = vunpack.c.l.b16 %v1362
    %v1465 = vunpack.c.l.b16 %v1363
    %v1466 = vunpack.c.l.b16 %v1364
    %v1467 = vunpack.c.l.b16 %v1365
    %v1468 = vunpack.c.l.b16 %v1366
    %v1469 = vunpack.c.l.b16 %v1367
    %v1470 = vunpack.c.l.b16 %v1368
    %v1471 = vunpack.c.l.b16 %v1369
    %v1472 = vunpack.c.l.b16 %v1370
    %v1473 = vunpack.c.l.b16 %v1371
    %v1474 = vunpack.c.l.b16 %v1372
    %v1475 = vunpack.c.l.b16 %v1373
    %v1476 = vunpack.c.l.b16 %v1374
    %v1477 = vunpack.c.l.b16 %v1375
    %v1478 = vunpack.c.l.b16 %v1376
    %v1479 = vunpack.c.l.b16 %v1377
    %v1480 = vunpack.c.l.b16 %v1378
    %v1481 = vunpack.c.l.b16 %v1379
    %v1482 = vunpack.c.l.b16 %v1380
    %v1483 = vunpack.c.l.b16 %v1381
    %v1484 = vunpack.c.l.b16 %v1382
    %v1485 = vunpack.c.l.b16 %v1383
    %v1486 = vunpack.c.l.b16 %v1384
    %v1487 = vunpack.c.l.b16 %v1385
    %v1488 = vunpack.c.l.b16 %v1386
    %v1489 = vunpack.c.l.b16 %v1387
    %v1490 = vunpack.c.l.b16 %v1388
    %v1491 = vunpack.c.l.b16 %v1389
    %v1492 = vunpack.c.l.b16 %v1390
    %v1493 = vunpack.c.l.b16 %v1391
    %v1494 = vunpack.c.l.b16 %v1392
    %v1495 = vunpack.c.l.b16 %v1393
    %v1496 = vunpack.c.l.b16 %v1394
    %v1497 = vunpack.c.l.b16 %v1395
    %v1498 = vunpack.c.l.b16 %v1396
    %v1499 = vunpack.c.l.b16 %v1397
    %v1500 = vunpack.c.l.b16 %v1398
    %v1501 = vunpack.c.l.b16 %v1399
    %v1502 = vunpack.c.l.b16 %v1400
    %v1503 = vunpack.c.l.b16 %v1401
    %v1504 = vunpack.c.l.b16 %v1402
    %v1505 = vunpack.c.l.b16 %v1403
    %v1506 = vunpack.c.l.b16 %v1404
    %v1507 = vunpack.c.l.b16 %v1405
    %v1508 = vpack.c.b16 %v1464, %v1463
    %v1509 = vpack.c.b16 %v1466, %v1465
    %v1510 = vpack.c.b16 %v1468, %v1467
    %v1511 = vpack.c.b16 %v1470, %v1469
    %v1512 = vpack.c.b16 %v1472, %v1471
    %v1513 = vpack.c.b16 %v1474, %v1473
    %v1514 = vpack.c.b16 %v1476, %v1475
    %v1515 = vpack.c.b16 %v1478, %v1477
    %v1516 = vpack.c.b16 %v1480, %v1479
    %v1517 = vpack.c.b16 %v1482, %v1481
    %v1518 = vpack.c.b16 %v1484, %v1483
    %v1519 = vpack.c.b16 %v1486, %v1485
    %v1520 = vpack.c.b16 %v1488, %v1487
    %v1521 = vpack.c.b16 %v1490, %v1489
    %v1522 = vpack.c.b16 %v1492, %v1491
    %v1523 = vpack.c.b16 %v1494, %v1493
    %v1524 = vpack.c.b16 %v1496, %v1495
    %v1525 = vpack.c.b16 %v1498, %v1497
    %v1526 = vpack.c.b16 %v1500, %v1499
    %v1527 = vpack.c.b16 %v1502, %v1501
    %v1528 = vpack.c.b16 %v1504, %v1503
    %v1529 = vpack.c.b16 %v1506, %v1505
    %v1530 = vpack.c.b16 %v1507, %v1507
    %vm1553 = vcmask 850944
    %v1555 = vsel %vm1553, %v1415, 0
    %vm1557 = vcmask 1043456
    %v1559 = vsel %vm1557, %v1530, 0
    %1561 = vmatprep.subr.bf16.mxu0 0
    %1562 = vmatpush1.bf16.msra.mxu0 %v1508
    %1563 = vmatprep.subr.bf16.mxu0 0
    %1564 = vmatpush1.bf16.msra.mxu0 %v1509
    %1565 = vmatprep.subr.bf16.mxu0 0
    %1566 = vmatpush1.bf16.msra.mxu0 %v1510
    %1567 = vmatprep.subr.bf16.mxu0 0
    %1568 = vmatpush1.bf16.msra.mxu0 %v1511
    %1569 = vmatprep.subr.bf16.mxu0 0
    %1570 = vmatpush1.bf16.msra.mxu0 %v1512
    %1571 = vmatprep.subr.bf16.mxu0 0
    %1572 = vmatpush1.bf16.msra.mxu0 %v1513
    %1573 = vmatprep.subr.bf16.mxu0 0
    %1574 = vmatpush1.bf16.msra.mxu0 %v1514
    %1575 = vmatprep.subr.bf16.mxu0 0
    %1576 = vmatpush1.bf16.msra.mxu0 %v1515
    %1577 = vmatprep.subr.bf16.mxu0 0
    %1578 = vmatpush1.bf16.msra.mxu0 %v1516
    %1579 = vmatprep.subr.bf16.mxu0 0
    %1580 = vmatpush1.bf16.msra.mxu0 %v1517
    %1581 = vmatprep.subr.bf16.mxu0 0
    %1582 = vmatpush1.bf16.msra.mxu0 %v1518
    %1583 = vmatprep.subr.bf16.mxu0 0
    %1584 = vmatpush1.bf16.msra.mxu0 %v1519
    %1585 = vmatprep.subr.bf16.mxu0 0
    %1586 = vmatpush1.bf16.msra.mxu0 %v1520
    %1587 = vmatprep.subr.bf16.mxu0 0
    %1588 = vmatpush1.bf16.msra.mxu0 %v1521
    %1589 = vmatprep.subr.bf16.mxu0 0
    %1590 = vmatpush1.bf16.msra.mxu0 %v1522
    %1591 = vmatprep.subr.bf16.mxu0 0
    %1592 = vmatpush1.bf16.msra.mxu0 %v1523
    %1593 = vmatprep.mubr.bf16.mxu0 %v1414
    %1594 = vmatmul.mubr.bf16.gmra.mrb[0].mxu0 %v1413
    %v1595 = vpop.f32.mrb[0].mxu0
    %v1596 = vadd.f32 %v1411, %v1595
    %v1597 = vpop.f32.mrb[0].mxu0
    %v1598 = vpop.f32.mrb[0].mxu0
    %v1599 = vadd.f32 %v1411, %v1598
    %v1600 = vpop.f32.mrb[0].mxu0
    %1601 = vdwg.mxu0
    %1602 = vmatprep.subr.bf16.mxu0 0
    %1603 = vmatpush1.bf16.msra.mxu0 %v1524
    %1604 = vmatprep.subr.bf16.mxu0 0
    %1605 = vmatpush1.bf16.msra.mxu0 %v1525
    %1606 = vmatprep.subr.bf16.mxu0 0
    %1607 = vmatpush1.bf16.msra.mxu0 %v1526
    %1608 = vmatprep.subr.bf16.mxu0 0
    %1609 = vmatpush1.bf16.msra.mxu0 %v1527
    %1610 = vmatprep.subr.bf16.mxu0 0
    %1611 = vmatpush1.bf16.msra.mxu0 %v1528
    %1612 = vmatprep.subr.bf16.mxu0 0
    %1613 = vmatpush1.bf16.msra.mxu0 %v1529
    %1614 = vmatprep.subr.bf16.mxu0 0
    %1615 = vmatpush1.bf16.msra.mxu0 %v1559
    %1616 = vmatprep.subr.bf16.mxu0 0
    %1617 = vmatpush1.bf16.msra.mxu0 0
    %1618 = vmatprep.subr.bf16.mxu0 0
    %1619 = vmatpush1.bf16.msra.mxu0 0
    %1620 = vmatprep.subr.bf16.mxu0 0
    %1621 = vmatpush1.bf16.msra.mxu0 0
    %1622 = vmatprep.subr.bf16.mxu0 0
    %1623 = vmatpush1.bf16.msra.mxu0 0
    %1624 = vmatprep.subr.bf16.mxu0 0
    %1625 = vmatpush1.bf16.msra.mxu0 0
    %1626 = vmatprep.subr.bf16.mxu0 0
    %1627 = vmatpush1.bf16.msra.mxu0 0
    %1628 = vmatprep.subr.bf16.mxu0 0
    %1629 = vmatpush1.bf16.msra.mxu0 0
    %1630 = vmatprep.subr.bf16.mxu0 0
    %1631 = vmatpush1.bf16.msra.mxu0 0
    %1632 = vmatprep.subr.bf16.mxu0 0
    %1633 = vmatpush1.bf16.msra.mxu0 0
    %1634 = vmatprep.mubr.bf16.mxu0 0
    %1635 = vmatmul.mubr.bf16.gmra.mrb[0].mxu0 %v1555
    %v1636 = vpop.f32.mrb[0].mxu0
    %v1637 = vadd.f32 %v1596, %v1636
    %v1638 = vpop.f32.mrb[0].mxu0
    %v1639 = vpop.f32.mrb[0].mxu0
    %v1640 = vadd.f32 %v1599, %v1639
    %v1641 = vpop.f32.mrb[0].mxu0
    %1642 = vdwg.mxu0
    %v1643 = vmax.f32 %v1637, 0.0
    %v1644 = vmax.f32 %v1640, 0.0
    %1647 = vrot.lane.b32.xlu0 %v1643, 64
    %v1648 = vpop.permute.xlu0 %1647
    %1649 = vrot.lane.b32.xlu0 %v1644, 64
    %v1650 = vpop.permute.xlu0 %1649
    %v1653 = vmax.f32 %v1643, %v1648
    %v1654 = vmax.f32 %v1644, %v1650
    %v1657 = vcombine.high %v1653, %v1653
    %v1659 = vunpack.c.l.s4 1983009808
    %v1660 = vunpack.c.0.s8 %v1659
    %v1661 = vlaneseq
    %v1662 = vshrl.u32 %v1661, 7
    %v1663 = vsub.s32 %v1660, %v1662
    %v1664 = vrot.slane %v1653, %v1663
    %v1666 = vunpack.c.l.s4 1983009808
    %v1667 = vunpack.c.0.s8 %v1666
    %v1668 = vlaneseq
    %v1669 = vshrl.u32 %v1668, 7
    %v1670 = vsub.s32 %v1667, %v1669
    %v1671 = vrot.slane %v1657, %v1670
    %v1672 = vcombine.high %v1664, %v1664
    %v1673 = vcombine.high %v1671, %v1671
    %v1674 = vcombine.high %v1654, %v1654
    %v1676 = vunpack.c.l.s4 1983009808
    %v1677 = vunpack.c.0.s8 %v1676
    %v1678 = vlaneseq
    %v1679 = vshrl.u32 %v1678, 7
    %v1680 = vsub.s32 %v1677, %v1679
    %v1681 = vrot.slane %v1654, %v1680
    %v1683 = vunpack.c.l.s4 1983009808
    %v1684 = vunpack.c.0.s8 %v1683
    %v1685 = vlaneseq
    %v1686 = vshrl.u32 %v1685, 7
    %v1687 = vsub.s32 %v1684, %v1686
    %v1688 = vrot.slane %v1674, %v1687
    %v1689 = vcombine.high %v1681, %v1681
    %v1690 = vcombine.high %v1688, %v1688
    %vm1699 = vcmask 517120
    %v1700 = vsel %vm1699, %v1664, -inf
    %v1701 = vrot.slane %v1700, 4
    %v1702 = vmax.f32 %v1700, %v1701
    %v1703 = vrot.slane %v1702, 2
    %v1704 = vmax.f32 %v1702, %v1703
    %v1705 = vrot.slane %v1704, 1
    %v1706 = vmax.f32 %v1704, %v1705
    %v1707 = vsel %vm1699, %v1672, -inf
    %v1708 = vrot.slane %v1707, 4
    %v1709 = vmax.f32 %v1707, %v1708
    %v1710 = vrot.slane %v1709, 2
    %v1711 = vmax.f32 %v1709, %v1710
    %v1712 = vrot.slane %v1711, 1
    %v1713 = vmax.f32 %v1711, %v1712
    %v1714 = vsel %vm1699, %v1671, -inf
    %v1715 = vrot.slane %v1714, 4
    %v1716 = vmax.f32 %v1714, %v1715
    %v1717 = vrot.slane %v1716, 2
    %v1718 = vmax.f32 %v1716, %v1717
    %v1719 = vrot.slane %v1718, 1
    %v1720 = vmax.f32 %v1718, %v1719
    %v1721 = vsel %vm1699, %v1673, -inf
    %v1722 = vrot.slane %v1721, 4
    %v1723 = vmax.f32 %v1721, %v1722
    %v1724 = vrot.slane %v1723, 2
    %v1725 = vmax.f32 %v1723, %v1724
    %v1726 = vrot.slane %v1725, 1
    %v1727 = vmax.f32 %v1725, %v1726
    %v1728 = vsel %vm1699, %v1681, -inf
    %v1729 = vrot.slane %v1728, 4
    %v1730 = vmax.f32 %v1728, %v1729
    %v1731 = vrot.slane %v1730, 2
    %v1732 = vmax.f32 %v1730, %v1731
    %v1733 = vrot.slane %v1732, 1
    %v1734 = vmax.f32 %v1732, %v1733
    %v1735 = vsel %vm1699, %v1689, -inf
    %v1736 = vrot.slane %v1735, 4
    %v1737 = vmax.f32 %v1735, %v1736
    %v1738 = vrot.slane %v1737, 2
    %v1739 = vmax.f32 %v1737, %v1738
    %v1740 = vrot.slane %v1739, 1
    %v1741 = vmax.f32 %v1739, %v1740
    %v1742 = vsel %vm1699, %v1688, -inf
    %v1743 = vrot.slane %v1742, 4
    %v1744 = vmax.f32 %v1742, %v1743
    %v1745 = vrot.slane %v1744, 2
    %v1746 = vmax.f32 %v1744, %v1745
    %v1747 = vrot.slane %v1746, 1
    %v1748 = vmax.f32 %v1746, %v1747
    %v1749 = vsel %vm1699, %v1690, -inf
    %v1750 = vrot.slane %v1749, 4
    %v1751 = vmax.f32 %v1749, %v1750
    %v1752 = vrot.slane %v1751, 2
    %v1753 = vmax.f32 %v1751, %v1752
    %v1754 = vrot.slane %v1753, 1
    %v1755 = vmax.f32 %v1753, %v1754
    %v1764 = vsel %vm1208, %v1713, %v1706
    %v1765 = vsel %vm1210, %v1720, %v1764
    %v1766 = vsel %vm1212, %v1727, %v1765
    %v1767 = vsel %vm1208, %v1741, %v1734
    %v1768 = vsel %vm1210, %v1748, %v1767
    %v1769 = vsel %vm1212, %v1755, %v1768
    %v1772 = vunpack.c.l.s4 1983009808
    %v1773 = vunpack.c.0.s8 %v1772
    %v1774 = vlaneseq
    %v1775 = vshrl.u32 %v1774, 7
    %v1776 = vsub.s32 %v1773, %v1775
    %v1777 = vrot.slane %v1766, %v1776
    %v1780 = vunpack.c.l.s4 1983009808
    %v1781 = vunpack.c.0.s8 %v1780
    %v1782 = vlaneseq
    %v1783 = vshrl.u32 %v1782, 7
    %v1784 = vsub.s32 %v1781, %v1783
    %v1785 = vrot.slane %v1769, %v1784
    %v1786 = vcombine.low %v1777, %v1785
    %v1787 = vcombine.high %v1777, %v1785
    %v1789 = vunpack.c.l.s4 1934713408
    %v1790 = vunpack.c.0.s8 %v1789
    %v1791 = vlaneseq
    %v1792 = vshrl.u32 %v1791, 7
    %v1793 = vsub.s32 %v1790, %v1792
    %v1794 = vrot.slane %v1786, %v1793
    %v1796 = vunpack.c.l.s4 1934713408
    %v1797 = vunpack.c.0.s8 %v1796
    %v1798 = vlaneseq
    %v1799 = vshrl.u32 %v1798, 7
    %v1800 = vsub.s32 %v1797, %v1799
    %v1801 = vrot.slane %v1787, %v1800
    %v1802 = vcombine.high %v1794, 0.0
    %v1803 = vcombine.high %v1801, 0.0
    %1805 = vrot.lane.b32.xlu0 %v1802, 64
    %v1806 = vpop.permute.xlu0 %1805
    %1809 = vrot.lane.b32.xlu0 %v1803, 64
    %v1810 = vpop.permute.xlu0 %1809
    %vm1812 = vcmask 523264
    %v1813 = vsel %vm1812, %v1794, %v1806
    %v1814 = vsel %vm1812, %v1801, %v1810
    %v1815 = vpack.c.bf16 %v1813, %v1813
    %v1816 = vpack.c.bf16 %v1814, %v1814
    %v1817 = vld [vmem:[#allocation5] sm:$0xf]
    %v1818 = vld [vmem:[#allocation5 + $0x4] sm:$0xf]
    %v1819 = vld [vmem:[#allocation5 + $0x8] sm:$0xf]
    %v1820 = vld [vmem:[#allocation5 + $0xc] sm:$0xf]
    %v1821 = vld [vmem:[#allocation5 + $0x10] sm:$0xf]
    %v1822 = vld [vmem:[#allocation5 + $0x14] sm:$0xf]
    %v1823 = vld [vmem:[#allocation5 + $0x18] sm:$0xf]
    %v1824 = vld [vmem:[#allocation5 + $0x1c] sm:$0xf]
    %v1825 = vld [vmem:[#allocation5 + $0x20] sm:$0xf]
    %v1826 = vld [vmem:[#allocation5 + $0x24] sm:$0xf]
    %v1827 = vld [vmem:[#allocation5 + $0x28] sm:$0xf]
    %v1828 = vld [vmem:[#allocation5 + $0x2c] sm:$0xf]
    %v1829 = vld [vmem:[#allocation5 + $0x30] sm:$0xf]
    %v1830 = vld [vmem:[#allocation5 + $0x34] sm:$0xf]
    %v1831 = vld [vmem:[#allocation5 + $0x38] sm:$0xf]
    %v1832 = vld [vmem:[#allocation5 + $0x3c] sm:$0xf]
    %v1833 = vld [vmem:[#allocation5 + $0x40] sm:$0xf]
    %v1834 = vld [vmem:[#allocation5 + $0x44] sm:$0xf]
    %v1835 = vld [vmem:[#allocation5 + $0x48] sm:$0xf]
    %v1836 = vld [vmem:[#allocation5 + $0x4c] sm:$0xf]
    %v1837 = vld [vmem:[#allocation5 + $0x50] sm:$0xf]
    %v1838 = vld [vmem:[#allocation5 + $0x54] sm:$0xf]
    %v1839 = vld [vmem:[#allocation5 + $0x58] sm:$0xf]
    %v1840 = vld [vmem:[#allocation5 + $0x5c] sm:$0xf]
    %v1841 = vld [vmem:[#allocation5 + $0x60] sm:$0xf]
    %v1842 = vld [vmem:[#allocation5 + $0x64] sm:$0xf]
    %v1843 = vld [vmem:[#allocation5 + $0x68] sm:$0xf]
    %v1844 = vld [vmem:[#allocation5 + $0x6c] sm:$0xf]
    %v1845 = vld [vmem:[#allocation5 + $0x70] sm:$0xf]
    %v1846 = vld [vmem:[#allocation5 + $0x74] sm:$0xf]
    %v1847 = vld [vmem:[#allocation5 + $0x78] sm:$0xf]
    %v1848 = vld [vmem:[#allocation5 + $0x7c] sm:$0xf]
    %v1849 = vld [vmem:[%s6] sm:$0x1]
    %v1851 = vlaneseq
    %v1852 = vshrl.u32 %v1851, 7
    %v1853 = vsub.s32 0, %v1852
    %v1854 = vrot.slane %v1849, %v1853
    %v1888 = vunpack.c.l.b16 %v1817
    %v1889 = vunpack.c.l.b16 %v1818
    %v1890 = vunpack.c.l.b16 %v1819
    %v1891 = vunpack.c.l.b16 %v1820
    %v1892 = vunpack.c.l.b16 %v1821
    %v1893 = vunpack.c.l.b16 %v1822
    %v1894 = vunpack.c.l.b16 %v1823
    %v1895 = vunpack.c.l.b16 %v1824
    %v1896 = vunpack.c.l.b16 %v1825
    %v1897 = vunpack.c.l.b16 %v1826
    %v1898 = vunpack.c.l.b16 %v1827
    %v1899 = vunpack.c.l.b16 %v1828
    %v1900 = vunpack.c.l.b16 %v1829
    %v1901 = vunpack.c.l.b16 %v1830
    %v1902 = vunpack.c.l.b16 %v1831
    %v1903 = vunpack.c.l.b16 %v1832
    %v1904 = vunpack.c.l.b16 %v1833
    %v1905 = vunpack.c.l.b16 %v1834
    %v1906 = vunpack.c.l.b16 %v1835
    %v1907 = vunpack.c.l.b16 %v1836
    %v1908 = vunpack.c.l.b16 %v1837
    %v1909 = vunpack.c.l.b16 %v1838
    %v1910 = vunpack.c.l.b16 %v1839
    %v1911 = vunpack.c.l.b16 %v1840
    %v1912 = vunpack.c.l.b16 %v1841
    %v1913 = vunpack.c.l.b16 %v1842
    %v1914 = vunpack.c.l.b16 %v1843
    %v1915 = vunpack.c.l.b16 %v1844
    %v1916 = vunpack.c.l.b16 %v1845
    %v1917 = vunpack.c.l.b16 %v1846
    %v1918 = vunpack.c.l.b16 %v1847
    %v1919 = vunpack.c.l.b16 %v1848
    %v1920 = vpack.c.b16 %v1889, %v1888
    %v1921 = vpack.c.b16 %v1891, %v1890
    %v1922 = vpack.c.b16 %v1893, %v1892
    %v1923 = vpack.c.b16 %v1895, %v1894
    %v1924 = vpack.c.b16 %v1897, %v1896
    %v1925 = vpack.c.b16 %v1899, %v1898
    %v1926 = vpack.c.b16 %v1901, %v1900
    %v1927 = vpack.c.b16 %v1903, %v1902
    %v1928 = vpack.c.b16 %v1905, %v1904
    %v1929 = vpack.c.b16 %v1907, %v1906
    %v1930 = vpack.c.b16 %v1909, %v1908
    %v1931 = vpack.c.b16 %v1911, %v1910
    %v1932 = vpack.c.b16 %v1913, %v1912
    %v1933 = vpack.c.b16 %v1915, %v1914
    %v1934 = vpack.c.b16 %v1917, %v1916
    %v1935 = vpack.c.b16 %v1919, %v1918
    %1952 = vmatprep.subr.bf16.mxu0 0
    %1953 = vmatpush1.bf16.msra.mxu0 %v1920
    %1954 = vmatprep.subr.bf16.mxu0 0
    %1955 = vmatpush1.bf16.msra.mxu0 %v1921
    %1956 = vmatprep.subr.bf16.mxu0 0
    %1957 = vmatpush1.bf16.msra.mxu0 %v1922
    %1958 = vmatprep.subr.bf16.mxu0 0
    %1959 = vmatpush1.bf16.msra.mxu0 %v1923
    %1960 = vmatprep.subr.bf16.mxu0 0
    %1961 = vmatpush1.bf16.msra.mxu0 %v1924
    %1962 = vmatprep.subr.bf16.mxu0 0
    %1963 = vmatpush1.bf16.msra.mxu0 %v1925
    %1964 = vmatprep.subr.bf16.mxu0 0
    %1965 = vmatpush1.bf16.msra.mxu0 %v1926
    %1966 = vmatprep.subr.bf16.mxu0 0
    %1967 = vmatpush1.bf16.msra.mxu0 %v1927
    %1968 = vmatprep.subr.bf16.mxu0 0
    %1969 = vmatpush1.bf16.msra.mxu0 %v1928
    %1970 = vmatprep.subr.bf16.mxu0 0
    %1971 = vmatpush1.bf16.msra.mxu0 %v1929
    %1972 = vmatprep.subr.bf16.mxu0 0
    %1973 = vmatpush1.bf16.msra.mxu0 %v1930
    %1974 = vmatprep.subr.bf16.mxu0 0
    %1975 = vmatpush1.bf16.msra.mxu0 %v1931
    %1976 = vmatprep.subr.bf16.mxu0 0
    %1977 = vmatpush1.bf16.msra.mxu0 %v1932
    %1978 = vmatprep.subr.bf16.mxu0 0
    %1979 = vmatpush1.bf16.msra.mxu0 %v1933
    %1980 = vmatprep.subr.bf16.mxu0 0
    %1981 = vmatpush1.bf16.msra.mxu0 %v1934
    %1982 = vmatprep.subr.bf16.mxu0 0
    %1983 = vmatpush1.bf16.msra.mxu0 %v1935
    %1984 = vmatprep.mubr.bf16.mxu0 %v1816
    %1985 = vmatmul.mubr.bf16.gmra.mrb[0].mxu0 %v1815
    %v1986 = vpop.f32.mrb[0].mxu0
    %v1987 = vadd.f32 %v1854, %v1986
    %v1988 = vpop.f32.mrb[0].mxu0
    %v1989 = vpop.f32.mrb[0].mxu0
    %v1990 = vpop.f32.mrb[0].mxu0
    %1991 = vdwg.mxu0
    %v1992 = vmax.f32 %v1987, 0.0
    %v1993 = vpack.c.bf16 %v1992, %v1992
    %v1994 = vld [vmem:[#allocation7] sm:$0xf]
    %v1995 = vld [vmem:[#allocation7 + $0x4] sm:$0xf]
    %v1996 = vld [vmem:[#allocation7 + $0x8] sm:$0xf]
    %v1997 = vld [vmem:[#allocation7 + $0xc] sm:$0xf]
    %v1998 = vld [vmem:[#allocation7 + $0x10] sm:$0xf]
    %v1999 = vld [vmem:[#allocation7 + $0x14] sm:$0xf]
    %v2000 = vld [vmem:[#allocation7 + $0x18] sm:$0xf]
    %v2001 = vld [vmem:[#allocation7 + $0x1c] sm:$0xf]
    %v2002 = vld [vmem:[#allocation7 + $0x20] sm:$0xf]
    %v2003 = vld [vmem:[#allocation7 + $0x24] sm:$0xf]
    %v2004 = vld [vmem:[#allocation7 + $0x28] sm:$0xf]
    %v2005 = vld [vmem:[#allocation7 + $0x2c] sm:$0xf]
    %v2006 = vld [vmem:[#allocation7 + $0x30] sm:$0xf]
    %v2007 = vld [vmem:[#allocation7 + $0x34] sm:$0xf]
    %v2008 = vld [vmem:[#allocation7 + $0x38] sm:$0xf]
    %v2009 = vld [vmem:[#allocation7 + $0x3c] sm:$0xf]
    %v2010 = vld [vmem:[%s8] sm:$0x1]
    %v2012 = vlaneseq
    %v2013 = vshrl.u32 %v2012, 7
    %v2014 = vsub.s32 0, %v2013
    %v2015 = vrot.slane %v2010, %v2014
    %v2033 = vunpack.c.l.b16 %v1994
    %v2034 = vunpack.c.l.b16 %v1995
    %v2035 = vunpack.c.l.b16 %v1996
    %v2036 = vunpack.c.l.b16 %v1997
    %v2037 = vunpack.c.l.b16 %v1998
    %v2038 = vunpack.c.l.b16 %v1999
    %v2039 = vunpack.c.l.b16 %v2000
    %v2040 = vunpack.c.l.b16 %v2001
    %v2041 = vunpack.c.l.b16 %v2002
    %v2042 = vunpack.c.l.b16 %v2003
    %v2043 = vunpack.c.l.b16 %v2004
    %v2044 = vunpack.c.l.b16 %v2005
    %v2045 = vunpack.c.l.b16 %v2006
    %v2046 = vunpack.c.l.b16 %v2007
    %v2047 = vunpack.c.l.b16 %v2008
    %v2048 = vunpack.c.l.b16 %v2009
    %v2049 = vpack.c.b16 %v2034, %v2033
    %v2050 = vpack.c.b16 %v2036, %v2035
    %v2051 = vpack.c.b16 %v2038, %v2037
    %v2052 = vpack.c.b16 %v2040, %v2039
    %v2053 = vpack.c.b16 %v2042, %v2041
    %v2054 = vpack.c.b16 %v2044, %v2043
    %v2055 = vpack.c.b16 %v2046, %v2045
    %v2056 = vpack.c.b16 %v2048, %v2047
    %2065 = vmatprep.subr.bf16.mxu0 0
    %2066 = vmatpush1.bf16.msra.mxu0 %v2049
    %2067 = vmatprep.subr.bf16.mxu0 0
    %2068 = vmatpush1.bf16.msra.mxu0 %v2050
    %2069 = vmatprep.subr.bf16.mxu0 0
    %2070 = vmatpush1.bf16.msra.mxu0 %v2051
    %2071 = vmatprep.subr.bf16.mxu0 0
    %2072 = vmatpush1.bf16.msra.mxu0 %v2052
    %2073 = vmatprep.subr.bf16.mxu0 0
    %2074 = vmatpush1.bf16.msra.mxu0 %v2053
    %2075 = vmatprep.subr.bf16.mxu0 0
    %2076 = vmatpush1.bf16.msra.mxu0 %v2054
    %2077 = vmatprep.subr.bf16.mxu0 0
    %2078 = vmatpush1.bf16.msra.mxu0 %v2055
    %2079 = vmatprep.subr.bf16.mxu0 0
    %2080 = vmatpush1.bf16.msra.mxu0 %v2056
    %2081 = vmatprep.subr.bf16.mxu0 0
    %2082 = vmatpush1.bf16.msra.mxu0 0
    %2083 = vmatprep.subr.bf16.mxu0 0
    %2084 = vmatpush1.bf16.msra.mxu0 0
    %2085 = vmatprep.subr.bf16.mxu0 0
    %2086 = vmatpush1.bf16.msra.mxu0 0
    %2087 = vmatprep.subr.bf16.mxu0 0
    %2088 = vmatpush1.bf16.msra.mxu0 0
    %2089 = vmatprep.subr.bf16.mxu0 0
    %2090 = vmatpush1.bf16.msra.mxu0 0
    %2091 = vmatprep.subr.bf16.mxu0 0
    %2092 = vmatpush1.bf16.msra.mxu0 0
    %2093 = vmatprep.subr.bf16.mxu0 0
    %2094 = vmatpush1.bf16.msra.mxu0 0
    %2095 = vmatprep.subr.bf16.mxu0 0
    %2096 = vmatpush1.bf16.msra.mxu0 0
    %2097 = vmatprep.mubr.bf16.mxu0 0
    %2098 = vmatmul.mubr.bf16.gmra.mrb[0].mxu0 %v1993
    %v2099 = vpop.f32.mrb[0].mxu0
    %v2100 = vadd.f32 %v2015, %v2099
    %v2101 = vpop.f32.mrb[0].mxu0
    %v2102 = vpop.f32.mrb[0].mxu0
    %v2103 = vpop.f32.mrb[0].mxu0
    %2104 = vdwg.mxu0
    %v2105 = vmax.f32 %v2100, 0.0
    %v2106 = vpack.c.bf16 %v2105, %v2105
    %v2107 = vld [vmem:[#allocation8] sm:$0xf]
    %v2108 = vld [vmem:[#allocation8 + $0x4] sm:$0xf]
    %v2109 = vld [vmem:[#allocation8 + $0x8] sm:$0xf]
    %v2110 = vld [vmem:[#allocation8 + $0xc] sm:$0xf]
    %v2111 = vld [vmem:[#allocation8 + $0x10] sm:$0xf]
    %v2112 = vld [vmem:[#allocation8 + $0x14] sm:$0xf]
    %v2113 = vld [vmem:[#allocation8 + $0x18] sm:$0xf]
    %v2114 = vld [vmem:[#allocation8 + $0x1c] sm:$0xf]
    %v2115 = vld [vmem:[#allocation8 + $0x20] sm:$0xf]
    %v2116 = vld [vmem:[#allocation8 + $0x24] sm:$0xf]
    %v2117 = vld [vmem:[#allocation8 + $0x28] sm:$0xf]
    %v2118 = vld [vmem:[#allocation8 + $0x2c] sm:$0xf]
    %v2119 = vld [vmem:[#allocation8 + $0x30] sm:$0xf]
    %v2120 = vld [vmem:[#allocation8 + $0x34] sm:$0xf]
    %v2121 = vld [vmem:[#allocation8 + $0x38] sm:$0xf]
    %v2122 = vld [vmem:[#allocation8 + $0x3c] sm:$0xf]
    %v2123 = vld [vmem:[%s10] sm:$0x1]
    %v2125 = vlaneseq
    %v2126 = vshrl.u32 %v2125, 7
    %v2127 = vsub.s32 0, %v2126
    %v2128 = vrot.slane %v2123, %v2127
    %v2146 = vunpack.c.l.b16 %v2107
    %v2147 = vunpack.c.l.b16 %v2108
    %v2148 = vunpack.c.l.b16 %v2109
    %v2149 = vunpack.c.l.b16 %v2110
    %v2150 = vunpack.c.l.b16 %v2111
    %v2151 = vunpack.c.l.b16 %v2112
    %v2152 = vunpack.c.l.b16 %v2113
    %v2153 = vunpack.c.l.b16 %v2114
    %v2154 = vunpack.c.l.b16 %v2115
    %v2155 = vunpack.c.l.b16 %v2116
    %v2156 = vunpack.c.l.b16 %v2117
    %v2157 = vunpack.c.l.b16 %v2118
    %v2158 = vunpack.c.l.b16 %v2119
    %v2159 = vunpack.c.l.b16 %v2120
    %v2160 = vunpack.c.l.b16 %v2121
    %v2161 = vunpack.c.l.b16 %v2122
    %v2162 = vpack.c.b16 %v2147, %v2146
    %v2163 = vpack.c.b16 %v2149, %v2148
    %v2164 = vpack.c.b16 %v2151, %v2150
    %v2165 = vpack.c.b16 %v2153, %v2152
    %v2166 = vpack.c.b16 %v2155, %v2154
    %v2167 = vpack.c.b16 %v2157, %v2156
    %v2168 = vpack.c.b16 %v2159, %v2158
    %v2169 = vpack.c.b16 %v2161, %v2160
    %2178 = vmatprep.subr.bf16.mxu0 0
    %2179 = vmatpush1.bf16.msra.mxu0 %v2162
    %2180 = vmatprep.subr.bf16.mxu0 0
    %2181 = vmatpush1.bf16.msra.mxu0 %v2163
    %2182 = vmatprep.subr.bf16.mxu0 0
    %2183 = vmatpush1.bf16.msra.mxu0 %v2164
    %2184 = vmatprep.subr.bf16.mxu0 0
    %2185 = vmatpush1.bf16.msra.mxu0 %v2165
    %2186 = vmatprep.subr.bf16.mxu0 0
    %2187 = vmatpush1.bf16.msra.mxu0 %v2166
    %2188 = vmatprep.subr.bf16.mxu0 0
    %2189 = vmatpush1.bf16.msra.mxu0 %v2167
    %2190 = vmatprep.subr.bf16.mxu0 0
    %2191 = vmatpush1.bf16.msra.mxu0 %v2168
    %2192 = vmatprep.subr.bf16.mxu0 0
    %2193 = vmatpush1.bf16.msra.mxu0 %v2169
    %2194 = vmatprep.subr.bf16.mxu0 0
    %2195 = vmatpush1.bf16.msra.mxu0 0
    %2196 = vmatprep.subr.bf16.mxu0 0
    %2197 = vmatpush1.bf16.msra.mxu0 0
    %2198 = vmatprep.subr.bf16.mxu0 0
    %2199 = vmatpush1.bf16.msra.mxu0 0
    %2200 = vmatprep.subr.bf16.mxu0 0
    %2201 = vmatpush1.bf16.msra.mxu0 0
    %2202 = vmatprep.subr.bf16.mxu0 0
    %2203 = vmatpush1.bf16.msra.mxu0 0
    %2204 = vmatprep.subr.bf16.mxu0 0
    %2205 = vmatpush1.bf16.msra.mxu0 0
    %2206 = vmatprep.subr.bf16.mxu0 0
    %2207 = vmatpush1.bf16.msra.mxu0 0
    %2208 = vmatprep.subr.bf16.mxu0 0
    %2209 = vmatpush1.bf16.msra.mxu0 0
    %2210 = vmatprep.mubr.bf16.mxu0 0
    %2211 = vmatmul.mubr.bf16.gmra.mrb[0].mxu0 %v2106
    %v2212 = vpop.f32.mrb[0].mxu0
    %v2213 = vadd.f32 %v2128, %v2212
    %v2214 = vpop.f32.mrb[0].mxu0
    %v2215 = vpop.f32.mrb[0].mxu0
    %v2216 = vpop.f32.mrb[0].mxu0
    %2217 = vdwg.mxu0
    %2218 = vst [vmem:[#allocation10] sm:$0x3] %v2213
    // Predicated region
    $region62: #{net_forward.1} parent=1 // pred_check
      _
    $region63: #{net_forward.1} parent=1 // pred_check_branch
      %2220 = sbr.rel (0) target = $region65
    $region64: #{net_forward.1} parent=1 // pred_region
      %s2222 = ssub.s32 32, 32
      %2223 = vsyncadd [#allocation4], %s2222
      %s2225 = sshll.u32 [#allocation10], 4
      %s2226 = int_to_ptr.vmem [resolvable:$true] %s2225
      %2228 = dma.vmem_to_hbm [thread:$0]  %s2226, 32, %s11, [#allocation4]
    $region65: #{net_forward.1} parent=1 // pred_fallthru
      _
    // Predicated region
    $region66: #{net_forward.1} parent=1 // pred_check
      _
    $region67: #{net_forward.1} parent=1 // pred_check_branch
      %2230 = sbr.rel (0) target = $region69
    $region68: #{net_forward.1} parent=1 // pred_region
      %2231 = dma.done [#allocation4], 32
    $region69: #{net_forward.1} parent=1 // pred_fallthru
      _
    %2232 = vsyncpa [#allocation3], 1
    %2233 = vsyncpa [#allocation6], 1
    %2234 = vsyncpa [#allocation9], 1
    %2235 = vsyncpa [#allocation4], 1

</llo_original>
